<compile_context>
chip_gen: v7x
topology: tpu7x:2x2x1
jax: 0.10.0
libtpu: 0.0.40
codegen_flags: <defaults>
</compile_context>

<pallas_src>
import math
import jax
import jax.numpy as jnp
from jax.experimental import pallas as pl
from jax.experimental.pallas import tpu as pltpu

NUM_CLASSES = 10          # Animals-10
GLOBAL_STEP = 0           # module starts with self.global_step = 0
ANNEALING_STEP = 113
ANNEALING_COEF = min(1.0, GLOBAL_STEP / ANNEALING_STEP)   # = 0.0 at step 0
LGAMMA_C = math.lgamma(float(NUM_CLASSES))                # lnB_uni constant
HALF_LOG_2PI = 0.5 * math.log(2.0 * math.pi)

VIT_DIM = 768
DEN_DIM = 1920

# Lanczos approximation (g = 7, 9 coefficients) — valid for x > 0.
# Only traced when ANNEALING_COEF != 0 (the KL branch); dead at step 0.
_LANCZOS_G = 7.0
_LANCZOS_COEFS = (
    0.99999999999980993,
    676.5203681218851,
    -1259.1392167224028,
    771.32342877765313,
    -176.61502916214059,
    12.507343278686905,
    -0.13857109526572012,
    9.9843695780195716e-6,
    1.5056327351493116e-7,
)


def _lgamma(x):
    """log Gamma(x) for x > 0 via Lanczos (exp/log/arith only). Cold path."""
    z = x - 1.0
    a = jnp.full_like(z, _LANCZOS_COEFS[0])
    for i, c in enumerate(_LANCZOS_COEFS[1:]):
        a = a + c / (z + (i + 1.0))
    t = z + _LANCZOS_G + 0.5
    return HALF_LOG_2PI + (z + 0.5) * jnp.log(t) - t + jnp.log(a)


def _digamma_asymptotic(x):
    """psi(x) via asymptotic series only — accurate for x >= ~7 (used for S)."""
    inv = 1.0 / x
    inv2 = inv * inv
    return jnp.log(x) - 0.5 * inv - inv2 * (
        (1.0 / 12.0) - inv2 * ((1.0 / 120.0) - inv2 * (1.0 / 252.0))
    )


def _digamma(x):
    """psi(x) for x > 0: 6-term recurrence collapsed to ONE rational divide.

    sum_{k=0}^{5} 1/(x+k) is accumulated as num/den (common denominator),
    so the hot path spends 1 divide instead of 6.  den = prod(x+k) stays well
    inside f32 range for any realistic alpha (< ~1e6).
    """
    num = jnp.ones_like(x)
    den = x
    for k in range(1, 6):
        xk = x + float(k)
        num = num * xk + den
        den = den * xk
    return _digamma_asymptotic(x + 6.0) - num / den


def _fast_recip(x):
    """1/x via EUP approximate reciprocal + one Newton step (~f32-exact)."""
    r = pl.reciprocal(x, approx=True)
    return r * (2.0 - x * r)


def _kl_term(label, alpha):
    """Annealed-KL term of torch ce_loss for one view, per-sample (N, 1).

    Cold path: only traced when ANNEALING_COEF != 0 (global_step > 0)."""
    alp = (alpha - 1.0) * (1.0 - label) + 1.0
    S_alp = jnp.sum(alp, axis=1, keepdims=True)
    lnB = _lgamma(S_alp) - jnp.sum(_lgamma(alp), axis=1, keepdims=True)
    dg0 = _digamma_asymptotic(S_alp)          # S_alp >= NUM_CLASSES
    dg1 = _digamma(alp)
    kl = jnp.sum((alp - 1.0) * (dg1 - dg0), axis=1, keepdims=True) + lnB - LGAMMA_C
    return kl


def mvc_head_kernel(vit_ref, den_ref, wv_ref, wd_ref, bv_ref, bd_ref, lab_ref,
                    logits_ref, loss_ref):
    C = NUM_CLASSES

    # ---- Linear heads: two bf16 MXU matmuls, f32 accumulation --------------
    # (K-split done in-kernel; no wrapper feature concat, no zero weight block.)
    ev0 = jnp.dot(vit_ref[...], wv_ref[...],
                  preferred_element_type=jnp.float32) + bv_ref[...]   # (TB, C)
    ev1 = jnp.dot(den_ref[...], wd_ref[...],
                  preferred_element_type=jnp.float32) + bd_ref[...]   # (TB, C)
    TB = ev0.shape[0]

    # NOTE: the reference applies NO nonlinearity to the head outputs
    # (evidence = linear output, alpha = evidence + 1), so we match that.
    alpha0 = ev0 + 1.0
    alpha1 = ev1 + 1.0

    # ---- DS_Combin_two(alpha0, alpha1) with shared reciprocals -------------
    S0 = jnp.sum(alpha0, axis=1, keepdims=True)
    S1 = jnp.sum(alpha1, axis=1, keepdims=True)
    inv_S0 = _fast_recip(S0)
    inv_S1 = _fast_recip(S1)
    b0 = ev0 * inv_S0                         # E0 / S0
    b1 = ev1 * inv_S1
    u0 = float(C) * inv_S0
    u1 = float(C) * inv_S1
    # sum_{i,j} b0_i b1_j - sum_i b0_i b1_i  (bb_sum - bb_diag, no rank-3 bmm)
    conflict = (jnp.sum(b0, axis=1, keepdims=True)
                * jnp.sum(b1, axis=1, keepdims=True)
                - jnp.sum(b0 * b1, axis=1, keepdims=True))
    denom = 1.0 - conflict
    inv_denom = 1.0 / denom                   # exact: keeps reference Inf behavior
    b_a = (b0 * b1 + b0 * u1 + b1 * u0) * inv_denom
    # S_a = C / u_a = C * denom / (u0*u1) = S0*S1*denom / C   (no divide)
    S_a = (S0 * S1 * denom) * (1.0 / float(C))
    e_a = b_a * S_a
    alpha_a = e_a + 1.0

    # ---- One-hot label built in-kernel (iota compare) ----------------------
    iota = jax.lax.broadcasted_iota(jnp.int32, (TB, C), 1)
    label = (iota == lab_ref[...]).astype(jnp.float32)            # (TB, C)

    # ---- ce_loss "A" terms, lane-packed: one digamma chain over (TB, 3C) ---
    # A_v = digamma(S_v) - sum(label * digamma(alpha_v))  (label is one-hot).
    alpha_pack = jnp.concatenate([alpha0, alpha1, alpha_a], axis=1)   # (TB, 3C)
    dg_pack = _digamma(alpha_pack)
    label3 = jnp.concatenate([label, label, label], axis=1)           # (TB, 3C)
    picked = jnp.sum(label3 * dg_pack, axis=1, keepdims=True)         # (TB, 1)
    S_a_sum = jnp.sum(alpha_a, axis=1, keepdims=True)                 # == S_a
    # S >= NUM_CLASSES (alpha >= 1) -> asymptotic digamma is exact to ~1e-10.
    dgS = (_digamma_asymptotic(S0) + _digamma_asymptotic(S1)
           + _digamma_asymptotic(S_a_sum))
    loss_ps = dgS - picked                                            # (TB, 1)

    # ---- Annealed KL branch: trace-time gated (coef == 0 at step 0) --------
    # NOTE: ANNEALING_COEF is baked at trace time from GLOBAL_STEP; advancing
    # global_step requires retracing (fine for this forward-pass kernel).
    if ANNEALING_COEF != 0.0:
        kl = (_kl_term(label, alpha0) + _kl_term(label, alpha1)
              + _kl_term(label, alpha_a))
        loss_ps = loss_ps + ANNEALING_COEF * kl

    logits_ref[...] = e_a                     # evidence_a = alpha_a - 1
    loss_ref[...] = loss_ps                   # per-sample; wrapper takes mean


def prepare_params(w_vit, b_vit, w_den, b_den):
    """One-time parameter prep (outside the per-step path).

    Head weights are pre-transposed and stored bf16 (MXU operands, halved DMA);
    biases stay f32 (added after the f32 accumulation)."""
    wv = jnp.asarray(w_vit, jnp.float32).T.astype(jnp.bfloat16)     # (768, C)
    wd = jnp.asarray(w_den, jnp.float32).T.astype(jnp.bfloat16)     # (1920, C)
    bv = jnp.asarray(b_vit, jnp.float32).reshape(1, NUM_CLASSES)
    bd = jnp.asarray(b_den, jnp.float32).reshape(1, NUM_CLASSES)
    return wv, wd, bv, bd


def mvc_forward(vit_feat, den_feat, labels, params, *, batch_tile=None):
    """Post-encoder MVC forward: returns {'loss': (), 'logits': (B, C)}."""
    B = vit_feat.shape[0]
    wv, wd, bv, bd = params

    # Generation-specific tile guidance (64 MiB VMEM / 2 TCs on v7x -> 512-1024;
    # 128 MiB single-TC on v5e/v6e -> ~2048 with raised vmem_limit_bytes).
    if batch_tile is None:
        batch_tile = B
    TB = min(batch_tile, B)
    assert B % TB == 0, "batch must be divisible by the batch tile"
    grid = (B // TB,)

    # bf16 MXU operands (fuses with the encoder epilogue; halves feature DMA).
    vit_bf = vit_feat.astype(jnp.bfloat16)
    den_bf = den_feat.astype(jnp.bfloat16)
    lab = labels.astype(jnp.int32).reshape(B, 1)

    logits, loss_ps = pl.pallas_call(
        mvc_head_kernel,
        out_shape=(
            jax.ShapeDtypeStruct((B, NUM_CLASSES), jnp.float32),
            jax.ShapeDtypeStruct((B, 1), jnp.float32),
        ),
        grid_spec=pltpu.PrefetchScalarGridSpec(
            num_scalar_prefetch=0,
            grid=grid,
            in_specs=[
                pl.BlockSpec((TB, VIT_DIM), lambda i: (i, 0)),
                pl.BlockSpec((TB, DEN_DIM), lambda i: (i, 0)),
                # Weights/biases: constant index_map -> stay resident across steps.
                pl.BlockSpec((VIT_DIM, NUM_CLASSES), lambda i: (0, 0)),
                pl.BlockSpec((DEN_DIM, NUM_CLASSES), lambda i: (0, 0)),
                pl.BlockSpec((1, NUM_CLASSES), lambda i: (0, 0)),
                pl.BlockSpec((1, NUM_CLASSES), lambda i: (0, 0)),
                pl.BlockSpec((TB, 1), lambda i: (i, 0)),
            ],
            out_specs=(
                pl.BlockSpec((TB, NUM_CLASSES), lambda i: (i, 0)),
                pl.BlockSpec((TB, 1), lambda i: (i, 0)),
            ),
        ),
        compiler_params=pltpu.CompilerParams(
            dimension_semantics=("parallel",)),    # 2 TCs on v7x when grid > 1
    )(vit_bf, den_bf, wv, wd, bv, bd, lab)

    # loss = torch.mean(sum of three per-sample ce_losses)
    return {"loss": jnp.mean(loss_ps), "logits": logits}


def standin_encoders(pixels, key):
    # TODO(synk): ViT-B/16 and DenseNet-201 pretrained backbones (checkpoint
    # loads) have no self-contained Pallas equivalent; replaced by deterministic
    # global-average-pool + fixed linear projections producing 768-/1920-dim
    # features.
    pooled = jnp.mean(pixels, axis=(2, 3))            # (B, 3)  (NCHW spatial pool)
    k1, k2 = jax.random.split(key)
    p_vit = jax.random.normal(k1, (pooled.shape[1], VIT_DIM), jnp.float32) * 0.1
    p_den = jax.random.normal(k2, (pooled.shape[1], DEN_DIM), jnp.float32) * 0.1
    return pooled @ p_vit, pooled @ p_den


if __name__ == "__main__":
    key = jax.random.PRNGKey(0)
    k_px, k_lab, k_enc, k_w1, k_w2 = jax.random.split(key, 5)

    B = 8
    pixels = jax.random.normal(k_px, (B, 3, 32, 32), jnp.float32)   # NCHW
    labels = jax.random.randint(k_lab, (B,), 0, NUM_CLASSES)

    vit_feat, den_feat = standin_encoders(pixels, k_enc)

    # nn.Linear parameters in PyTorch layout (out_features, in_features),
    # deterministic init; small weights + positive bias keep alpha > 0.
    w_vit = jax.random.normal(k_w1, (NUM_CLASSES, VIT_DIM), jnp.float32) * 0.01
    b_vit = jnp.full((NUM_CLASSES,), 0.5, jnp.float32)
    w_den = jax.random.normal(k_w2, (NUM_CLASSES, DEN_DIM), jnp.float32) * 0.01
    b_den = jnp.full((NUM_CLASSES,), 0.5, jnp.float32)

    params = prepare_params(w_vit, b_vit, w_den, b_den)   # one-time prep

    out = mvc_forward(vit_feat, den_feat, labels, params)
    jax.block_until_ready(out)
    assert out["logits"].shape == (B, NUM_CLASSES)
    assert out["loss"].shape == ()
    assert bool(jnp.isfinite(out["loss"]))
    print("KERNEL_OK")
</pallas_src>

<mosaic_0001>
module attributes {stable_mosaic.version = 11 : i64} {
  func.func @mvc_head_kernel(%arg0: i32, %arg1: memref<8x768xbf16, #tpu.memory_space<vmem>>, %arg2: memref<8x1920xbf16, #tpu.memory_space<vmem>>, %arg3: memref<768x10xbf16, #tpu.memory_space<vmem>>, %arg4: memref<1920x10xbf16, #tpu.memory_space<vmem>>, %arg5: memref<1x10xf32, #tpu.memory_space<vmem>>, %arg6: memref<1x10xf32, #tpu.memory_space<vmem>>, %arg7: memref<8x1xi32, #tpu.memory_space<vmem>>, %arg8: memref<8x10xf32, #tpu.memory_space<vmem>>, %arg9: memref<8x1xf32, #tpu.memory_space<vmem>>) attributes {dimension_semantics = [#tpu.dimension_semantics<parallel>], iteration_bounds = array<i64: 1>, scalar_prefetch = 0 : i64, scratch_operands = 0 : i64, tpu.core_type = #tpu.core_type<tc>, window_params = [{transform_indices = @transform_0, window_bounds = array<i64: 8, 768>}, {transform_indices = @transform_1, window_bounds = array<i64: 8, 1920>}, {pipeline_mode = #tpu.pipeline_mode<synchronous>, transform_indices = @transform_2, window_bounds = array<i64: 768, 10>}, {pipeline_mode = #tpu.pipeline_mode<synchronous>, transform_indices = @transform_3, window_bounds = array<i64: 1920, 10>}, {pipeline_mode = #tpu.pipeline_mode<synchronous>, transform_indices = @transform_4, window_bounds = array<i64: 1, 10>}, {pipeline_mode = #tpu.pipeline_mode<synchronous>, transform_indices = @transform_5, window_bounds = array<i64: 1, 10>}, {transform_indices = @transform_6, window_bounds = array<i64: 8, 1>}, {transform_indices = @transform_7, window_bounds = array<i64: 8, 10>}, {transform_indices = @transform_8, window_bounds = array<i64: 8, 1>}]} {
    %c0 = arith.constant 0 : index
    %c0_0 = arith.constant 0 : index
    %0 = vector.load %arg1[%c0, %c0_0] : memref<8x768xbf16, #tpu.memory_space<vmem>>, vector<8x768xbf16>
    %c0_1 = arith.constant 0 : index
    %c0_2 = arith.constant 0 : index
    %1 = vector.load %arg3[%c0_1, %c0_2] : memref<768x10xbf16, #tpu.memory_space<vmem>>, vector<768x10xbf16>
    %cst = arith.constant dense<0.000000e+00> : vector<8x10xf32>
    %2 = tpu.matmul %0, %1, %cst {dimension_numbers = #tpu.dot_dimension_numbers<[1], [0], [0], [1], [0, 0, 1, 1], [], []>} : vector<8x768xbf16>, vector<768x10xbf16>, vector<8x10xf32> -> vector<8x10xf32>
    %c0_3 = arith.constant 0 : index
    %c0_4 = arith.constant 0 : index
    %3 = vector.load %arg5[%c0_3, %c0_4] : memref<1x10xf32, #tpu.memory_space<vmem>>, vector<1x10xf32>
    %4 = vector.broadcast %3 : vector<1x10xf32> to vector<8x10xf32>
    %5 = arith.addf %2, %4 : vector<8x10xf32>
    %c0_5 = arith.constant 0 : index
    %c0_6 = arith.constant 0 : index
    %6 = vector.load %arg2[%c0_5, %c0_6] : memref<8x1920xbf16, #tpu.memory_space<vmem>>, vector<8x1920xbf16>
    %c0_7 = arith.constant 0 : index
    %c0_8 = arith.constant 0 : index
    %7 = vector.load %arg4[%c0_7, %c0_8] : memref<1920x10xbf16, #tpu.memory_space<vmem>>, vector<1920x10xbf16>
    %cst_9 = arith.constant dense<0.000000e+00> : vector<8x10xf32>
    %8 = tpu.matmul %6, %7, %cst_9 {dimension_numbers = #tpu.dot_dimension_numbers<[1], [0], [0], [1], [0, 0, 1, 1], [], []>} : vector<8x1920xbf16>, vector<1920x10xbf16>, vector<8x10xf32> -> vector<8x10xf32>
    %c0_10 = arith.constant 0 : index
    %c0_11 = arith.constant 0 : index
    %9 = vector.load %arg6[%c0_10, %c0_11] : memref<1x10xf32, #tpu.memory_space<vmem>>, vector<1x10xf32>
    %10 = vector.broadcast %9 : vector<1x10xf32> to vector<8x10xf32>
    %11 = arith.addf %8, %10 : vector<8x10xf32>
    %cst_12 = arith.constant 1.000000e+00 : f32
    %12 = vector.broadcast %cst_12 : f32 to vector<8x10xf32>
    %13 = arith.addf %5, %12 : vector<8x10xf32>
    %cst_13 = arith.constant 1.000000e+00 : f32
    %14 = vector.broadcast %cst_13 : f32 to vector<8x10xf32>
    %15 = arith.addf %11, %14 : vector<8x10xf32>
    %cst_14 = arith.constant dense<0.000000e+00> : vector<8xf32>
    %16 = vector.multi_reduction <add>, %13, %cst_14 [1] : vector<8x10xf32> to vector<8xf32>
    %17 = vector.shape_cast %16 : vector<8xf32> to vector<8x1xf32>
    %cst_15 = arith.constant dense<0.000000e+00> : vector<8xf32>
    %18 = vector.multi_reduction <add>, %15, %cst_15 [1] : vector<8x10xf32> to vector<8xf32>
    %19 = vector.shape_cast %18 : vector<8xf32> to vector<8x1xf32>
    %20 = tpu.reciprocal %17 {approx = true} : vector<8x1xf32> -> vector<8x1xf32>
    %21 = arith.mulf %17, %20 : vector<8x1xf32>
    %cst_16 = arith.constant 2.000000e+00 : f32
    %22 = vector.broadcast %cst_16 : f32 to vector<8x1xf32>
    %23 = arith.subf %22, %21 : vector<8x1xf32>
    %24 = arith.mulf %20, %23 : vector<8x1xf32>
    %25 = tpu.reciprocal %19 {approx = true} : vector<8x1xf32> -> vector<8x1xf32>
    %26 = arith.mulf %19, %25 : vector<8x1xf32>
    %cst_17 = arith.constant 2.000000e+00 : f32
    %27 = vector.broadcast %cst_17 : f32 to vector<8x1xf32>
    %28 = arith.subf %27, %26 : vector<8x1xf32>
    %29 = arith.mulf %25, %28 : vector<8x1xf32>
    %30 = vector.broadcast %24 : vector<8x1xf32> to vector<8x10xf32>
    %31 = arith.mulf %5, %30 : vector<8x10xf32>
    %32 = vector.broadcast %29 : vector<8x1xf32> to vector<8x10xf32>
    %33 = arith.mulf %11, %32 : vector<8x10xf32>
    %cst_18 = arith.constant 1.000000e+01 : f32
    %34 = vector.broadcast %cst_18 : f32 to vector<8x1xf32>
    %35 = arith.mulf %34, %24 : vector<8x1xf32>
    %cst_19 = arith.constant 1.000000e+01 : f32
    %36 = vector.broadcast %cst_19 : f32 to vector<8x1xf32>
    %37 = arith.mulf %36, %29 : vector<8x1xf32>
    %cst_20 = arith.constant dense<0.000000e+00> : vector<8xf32>
    %38 = vector.multi_reduction <add>, %31, %cst_20 [1] : vector<8x10xf32> to vector<8xf32>
    %39 = vector.shape_cast %38 : vector<8xf32> to vector<8x1xf32>
    %cst_21 = arith.constant dense<0.000000e+00> : vector<8xf32>
    %40 = vector.multi_reduction <add>, %33, %cst_21 [1] : vector<8x10xf32> to vector<8xf32>
    %41 = vector.shape_cast %40 : vector<8xf32> to vector<8x1xf32>
    %42 = arith.mulf %39, %41 : vector<8x1xf32>
    %43 = arith.mulf %31, %33 : vector<8x10xf32>
    %cst_22 = arith.constant dense<0.000000e+00> : vector<8xf32>
    %44 = vector.multi_reduction <add>, %43, %cst_22 [1] : vector<8x10xf32> to vector<8xf32>
    %45 = vector.shape_cast %44 : vector<8xf32> to vector<8x1xf32>
    %46 = arith.subf %42, %45 : vector<8x1xf32>
    %cst_23 = arith.constant 1.000000e+00 : f32
    %47 = vector.broadcast %cst_23 : f32 to vector<8x1xf32>
    %48 = arith.subf %47, %46 : vector<8x1xf32>
    %cst_24 = arith.constant 1.000000e+00 : f32
    %49 = vector.broadcast %cst_24 : f32 to vector<8x1xf32>
    %50 = arith.divf %49, %48 : vector<8x1xf32>
    %51 = arith.mulf %31, %33 : vector<8x10xf32>
    %52 = vector.broadcast %37 : vector<8x1xf32> to vector<8x10xf32>
    %53 = arith.mulf %31, %52 : vector<8x10xf32>
    %54 = arith.addf %51, %53 : vector<8x10xf32>
    %55 = vector.broadcast %35 : vector<8x1xf32> to vector<8x10xf32>
    %56 = arith.mulf %33, %55 : vector<8x10xf32>
    %57 = arith.addf %54, %56 : vector<8x10xf32>
    %58 = vector.broadcast %50 : vector<8x1xf32> to vector<8x10xf32>
    %59 = arith.mulf %57, %58 : vector<8x10xf32>
    %60 = arith.mulf %17, %19 : vector<8x1xf32>
    %61 = arith.mulf %60, %48 : vector<8x1xf32>
    %cst_25 = arith.constant 1.000000e-01 : f32
    %62 = vector.broadcast %cst_25 : f32 to vector<8x1xf32>
    %63 = arith.mulf %61, %62 : vector<8x1xf32>
    %64 = vector.broadcast %63 : vector<8x1xf32> to vector<8x10xf32>
    %65 = arith.mulf %59, %64 : vector<8x10xf32>
    %cst_26 = arith.constant 1.000000e+00 : f32
    %66 = vector.broadcast %cst_26 : f32 to vector<8x10xf32>
    %67 = arith.addf %65, %66 : vector<8x10xf32>
    %68 = tpu.iota {dimensions = array<i32: 1>} : vector<8x10xi32>
    %c0_27 = arith.constant 0 : index
    %c0_28 = arith.constant 0 : index
    %69 = vector.load %arg7[%c0_27, %c0_28] : memref<8x1xi32, #tpu.memory_space<vmem>>, vector<8x1xi32>
    %70 = vector.broadcast %69 : vector<8x1xi32> to vector<8x10xi32>
    %71 = arith.cmpi eq, %68, %70 : vector<8x10xi32>
    %72 = arith.extui %71 : vector<8x10xi1> to vector<8x10xi32>
    %73 = arith.sitofp %72 : vector<8x10xi32> to vector<8x10xf32>
    %74 = tpu.concatenate %13, %15, %67 in 1 : vector<8x10xf32>, vector<8x10xf32>, vector<8x10xf32> -> vector<8x30xf32>
    %cst_29 = arith.constant 1.000000e+00 : f32
    %75 = vector.broadcast %cst_29 : f32 to vector<8x30xf32>
    %cst_30 = arith.constant 1.000000e+00 : f32
    %76 = vector.broadcast %cst_30 : f32 to vector<8x30xf32>
    %77 = arith.addf %74, %76 : vector<8x30xf32>
    %78 = arith.mulf %75, %77 : vector<8x30xf32>
    %79 = arith.addf %78, %74 : vector<8x30xf32>
    %80 = arith.mulf %74, %77 : vector<8x30xf32>
    %cst_31 = arith.constant 2.000000e+00 : f32
    %81 = vector.broadcast %cst_31 : f32 to vector<8x30xf32>
    %82 = arith.addf %74, %81 : vector<8x30xf32>
    %83 = arith.mulf %79, %82 : vector<8x30xf32>
    %84 = arith.addf %83, %80 : vector<8x30xf32>
    %85 = arith.mulf %80, %82 : vector<8x30xf32>
    %cst_32 = arith.constant 3.000000e+00 : f32
    %86 = vector.broadcast %cst_32 : f32 to vector<8x30xf32>
    %87 = arith.addf %74, %86 : vector<8x30xf32>
    %88 = arith.mulf %84, %87 : vector<8x30xf32>
    %89 = arith.addf %88, %85 : vector<8x30xf32>
    %90 = arith.mulf %85, %87 : vector<8x30xf32>
    %cst_33 = arith.constant 4.000000e+00 : f32
    %91 = vector.broadcast %cst_33 : f32 to vector<8x30xf32>
    %92 = arith.addf %74, %91 : vector<8x30xf32>
    %93 = arith.mulf %89, %92 : vector<8x30xf32>
    %94 = arith.addf %93, %90 : vector<8x30xf32>
    %95 = arith.mulf %90, %92 : vector<8x30xf32>
    %cst_34 = arith.constant 5.000000e+00 : f32
    %96 = vector.broadcast %cst_34 : f32 to vector<8x30xf32>
    %97 = arith.addf %74, %96 : vector<8x30xf32>
    %98 = arith.mulf %94, %97 : vector<8x30xf32>
    %99 = arith.addf %98, %95 : vector<8x30xf32>
    %100 = arith.mulf %95, %97 : vector<8x30xf32>
    %cst_35 = arith.constant 6.000000e+00 : f32
    %101 = vector.broadcast %cst_35 : f32 to vector<8x30xf32>
    %102 = arith.addf %74, %101 : vector<8x30xf32>
    %cst_36 = arith.constant 1.000000e+00 : f32
    %103 = vector.broadcast %cst_36 : f32 to vector<8x30xf32>
    %104 = arith.divf %103, %102 : vector<8x30xf32>
    %105 = arith.mulf %104, %104 : vector<8x30xf32>
    %106 = math.log %102 : vector<8x30xf32>
    %cst_37 = arith.constant 5.000000e-01 : f32
    %107 = vector.broadcast %cst_37 : f32 to vector<8x30xf32>
    %108 = arith.mulf %107, %104 : vector<8x30xf32>
    %109 = arith.subf %106, %108 : vector<8x30xf32>
    %cst_38 = arith.constant 0.0039682542 : f32
    %110 = vector.broadcast %cst_38 : f32 to vector<8x30xf32>
    %111 = arith.mulf %105, %110 : vector<8x30xf32>
    %cst_39 = arith.constant 0.00833333377 : f32
    %112 = vector.broadcast %cst_39 : f32 to vector<8x30xf32>
    %113 = arith.subf %112, %111 : vector<8x30xf32>
    %114 = arith.mulf %105, %113 : vector<8x30xf32>
    %cst_40 = arith.constant 0.0833333358 : f32
    %115 = vector.broadcast %cst_40 : f32 to vector<8x30xf32>
    %116 = arith.subf %115, %114 : vector<8x30xf32>
    %117 = arith.mulf %105, %116 : vector<8x30xf32>
    %118 = arith.subf %109, %117 : vector<8x30xf32>
    %119 = arith.divf %99, %100 : vector<8x30xf32>
    %120 = arith.subf %118, %119 : vector<8x30xf32>
    %121 = tpu.concatenate %73, %73, %73 in 1 : vector<8x10xf32>, vector<8x10xf32>, vector<8x10xf32> -> vector<8x30xf32>
    %122 = arith.mulf %121, %120 : vector<8x30xf32>
    %cst_41 = arith.constant dense<0.000000e+00> : vector<8xf32>
    %123 = vector.multi_reduction <add>, %122, %cst_41 [1] : vector<8x30xf32> to vector<8xf32>
    %124 = vector.shape_cast %123 : vector<8xf32> to vector<8x1xf32>
    %cst_42 = arith.constant dense<0.000000e+00> : vector<8xf32>
    %125 = vector.multi_reduction <add>, %67, %cst_42 [1] : vector<8x10xf32> to vector<8xf32>
    %126 = vector.shape_cast %125 : vector<8xf32> to vector<8x1xf32>
    %cst_43 = arith.constant 1.000000e+00 : f32
    %127 = vector.broadcast %cst_43 : f32 to vector<8x1xf32>
    %128 = arith.divf %127, %17 : vector<8x1xf32>
    %129 = arith.mulf %128, %128 : vector<8x1xf32>
    %130 = math.log %17 : vector<8x1xf32>
    %cst_44 = arith.constant 5.000000e-01 : f32
    %131 = vector.broadcast %cst_44 : f32 to vector<8x1xf32>
    %132 = arith.mulf %131, %128 : vector<8x1xf32>
    %133 = arith.subf %130, %132 : vector<8x1xf32>
    %cst_45 = arith.constant 0.0039682542 : f32
    %134 = vector.broadcast %cst_45 : f32 to vector<8x1xf32>
    %135 = arith.mulf %129, %134 : vector<8x1xf32>
    %cst_46 = arith.constant 0.00833333377 : f32
    %136 = vector.broadcast %cst_46 : f32 to vector<8x1xf32>
    %137 = arith.subf %136, %135 : vector<8x1xf32>
    %138 = arith.mulf %129, %137 : vector<8x1xf32>
    %cst_47 = arith.constant 0.0833333358 : f32
    %139 = vector.broadcast %cst_47 : f32 to vector<8x1xf32>
    %140 = arith.subf %139, %138 : vector<8x1xf32>
    %141 = arith.mulf %129, %140 : vector<8x1xf32>
    %142 = arith.subf %133, %141 : vector<8x1xf32>
    %cst_48 = arith.constant 1.000000e+00 : f32
    %143 = vector.broadcast %cst_48 : f32 to vector<8x1xf32>
    %144 = arith.divf %143, %19 : vector<8x1xf32>
    %145 = arith.mulf %144, %144 : vector<8x1xf32>
    %146 = math.log %19 : vector<8x1xf32>
    %cst_49 = arith.constant 5.000000e-01 : f32
    %147 = vector.broadcast %cst_49 : f32 to vector<8x1xf32>
    %148 = arith.mulf %147, %144 : vector<8x1xf32>
    %149 = arith.subf %146, %148 : vector<8x1xf32>
    %cst_50 = arith.constant 0.0039682542 : f32
    %150 = vector.broadcast %cst_50 : f32 to vector<8x1xf32>
    %151 = arith.mulf %145, %150 : vector<8x1xf32>
    %cst_51 = arith.constant 0.00833333377 : f32
    %152 = vector.broadcast %cst_51 : f32 to vector<8x1xf32>
    %153 = arith.subf %152, %151 : vector<8x1xf32>
    %154 = arith.mulf %145, %153 : vector<8x1xf32>
    %cst_52 = arith.constant 0.0833333358 : f32
    %155 = vector.broadcast %cst_52 : f32 to vector<8x1xf32>
    %156 = arith.subf %155, %154 : vector<8x1xf32>
    %157 = arith.mulf %145, %156 : vector<8x1xf32>
    %158 = arith.subf %149, %157 : vector<8x1xf32>
    %159 = arith.addf %142, %158 : vector<8x1xf32>
    %cst_53 = arith.constant 1.000000e+00 : f32
    %160 = vector.broadcast %cst_53 : f32 to vector<8x1xf32>
    %161 = arith.divf %160, %126 : vector<8x1xf32>
    %162 = arith.mulf %161, %161 : vector<8x1xf32>
    %163 = math.log %126 : vector<8x1xf32>
    %cst_54 = arith.constant 5.000000e-01 : f32
    %164 = vector.broadcast %cst_54 : f32 to vector<8x1xf32>
    %165 = arith.mulf %164, %161 : vector<8x1xf32>
    %166 = arith.subf %163, %165 : vector<8x1xf32>
    %cst_55 = arith.constant 0.0039682542 : f32
    %167 = vector.broadcast %cst_55 : f32 to vector<8x1xf32>
    %168 = arith.mulf %162, %167 : vector<8x1xf32>
    %cst_56 = arith.constant 0.00833333377 : f32
    %169 = vector.broadcast %cst_56 : f32 to vector<8x1xf32>
    %170 = arith.subf %169, %168 : vector<8x1xf32>
    %171 = arith.mulf %162, %170 : vector<8x1xf32>
    %cst_57 = arith.constant 0.0833333358 : f32
    %172 = vector.broadcast %cst_57 : f32 to vector<8x1xf32>
    %173 = arith.subf %172, %171 : vector<8x1xf32>
    %174 = arith.mulf %162, %173 : vector<8x1xf32>
    %175 = arith.subf %166, %174 : vector<8x1xf32>
    %176 = arith.addf %159, %175 : vector<8x1xf32>
    %177 = arith.subf %176, %124 : vector<8x1xf32>
    %c0_58 = arith.constant 0 : index
    %c0_59 = arith.constant 0 : index
    %178 = vector.load %arg8[%c0_58, %c0_59] : memref<8x10xf32, #tpu.memory_space<vmem>>, vector<8x10xf32>
    tpu.vector_store %arg8[%c0_58, %c0_59], %65 {strides = array<i32>} : memref<8x10xf32, #tpu.memory_space<vmem>>, vector<8x10xf32>,
    %c0_60 = arith.constant 0 : index
    %c0_61 = arith.constant 0 : index
    %179 = vector.load %arg9[%c0_60, %c0_61] : memref<8x1xf32, #tpu.memory_space<vmem>>, vector<8x1xf32>
    tpu.vector_store %arg9[%c0_60, %c0_61], %177 {strides = array<i32>} : memref<8x1xf32, #tpu.memory_space<vmem>>, vector<8x1xf32>,
    return
  }
  func.func @transform_0(%arg0: i32) -> (i32, i32) {
    %c0_i32 = arith.constant 0 : i32
    %c0_i32_0 = arith.constant 0 : i32
    return %arg0, %c0_i32 : i32, i32
  }
  func.func @transform_1(%arg0: i32) -> (i32, i32) {
    %c0_i32 = arith.constant 0 : i32
    %c0_i32_0 = arith.constant 0 : i32
    return %arg0, %c0_i32 : i32, i32
  }
  func.func @transform_2(%arg0: i32) -> (i32, i32) {
    %c0_i32 = arith.constant 0 : i32
    %c0_i32_0 = arith.constant 0 : i32
    %c0_i32_1 = arith.constant 0 : i32
    return %c0_i32, %c0_i32_0 : i32, i32
  }
  func.func @transform_3(%arg0: i32) -> (i32, i32) {
    %c0_i32 = arith.constant 0 : i32
    %c0_i32_0 = arith.constant 0 : i32
    %c0_i32_1 = arith.constant 0 : i32
    return %c0_i32, %c0_i32_0 : i32, i32
  }
  func.func @transform_4(%arg0: i32) -> (i32, i32) {
    %c0_i32 = arith.constant 0 : i32
    %c0_i32_0 = arith.constant 0 : i32
    %c0_i32_1 = arith.constant 0 : i32
    return %c0_i32, %c0_i32_0 : i32, i32
  }
  func.func @transform_5(%arg0: i32) -> (i32, i32) {
    %c0_i32 = arith.constant 0 : i32
    %c0_i32_0 = arith.constant 0 : i32
    %c0_i32_1 = arith.constant 0 : i32
    return %c0_i32, %c0_i32_0 : i32, i32
  }
  func.func @transform_6(%arg0: i32) -> (i32, i32) {
    %c0_i32 = arith.constant 0 : i32
    %c0_i32_0 = arith.constant 0 : i32
    return %arg0, %c0_i32 : i32, i32
  }
  func.func @transform_7(%arg0: i32) -> (i32, i32) {
    %c0_i32 = arith.constant 0 : i32
    %c0_i32_0 = arith.constant 0 : i32
    return %arg0, %c0_i32 : i32, i32
  }
  func.func @transform_8(%arg0: i32) -> (i32, i32) {
    %c0_i32 = arith.constant 0 : i32
    %c0_i32_0 = arith.constant 0 : i32
    return %arg0, %c0_i32 : i32, i32
  }
}

</mosaic_0001>

<llo_original>
// kernel: tpu_custom_call.1
$region0: #{tpu_custom_call.1}
  #allocation0 [shape = 'u32[]', space=smem, size = 0x4, offset = 0x4, fixed_abs, tag = 'smem constant byte address 0x4 - core index']
  #allocation1 [shape = 'u32[144,128]{1,0:T(1,128)}', space=vmem, size = 0x12000, scoped, tag = 'internal scratch']
  %s0 = inlined_call_operand.vmem [shape: bf16[8,768], index: 0, kind: input, shape index: {}]
  %s1 = inlined_call_operand.vmem [shape: bf16[8,1920], index: 1, kind: input, shape index: {}]
  %s2 = inlined_call_operand.vmem [shape: bf16[768,10], index: 2, kind: input, shape index: {}]
  %s3 = inlined_call_operand.vmem [shape: bf16[1920,10], index: 3, kind: input, shape index: {}]
  %s4 = inlined_call_operand.vmem [shape: f32[1,10], index: 4, kind: input, shape index: {}]
  %s5 = inlined_call_operand.vmem [shape: f32[1,10], index: 5, kind: input, shape index: {}]
  %s6 = inlined_call_operand.vmem [shape: s32[8,1], index: 6, kind: input, shape index: {}]
  %s7 = inlined_call_operand.hbm [shape: f32[8,10], index: 7, kind: output, shape index: {0}]
  %s8 = inlined_call_operand.vmem [shape: f32[8,1], index: 8, kind: output, shape index: {1}]
  %9 = xla_tuple %s7, %s8
  %s10 = sld [smem:[#allocation0]]
  $region46: #{tpu_custom_call.1} parent=0
    _
  %s12 = ssub.s32 1, %s10
  %s13 = scalar_select 0, %s12, %s10
  $region1: #{tpu_custom_call.1} parent=0
    #allocation2 [shape = 'u8[4096]{0}', space=vmem, size = 0x1000, scoped, tag = 'output window, operand 0, single buffered']
    #allocation3 [shape = 's32[1]{0}', space=sflag, size = 0x4, scoped, tag = 'scoped memory for tpu_custom_call.1']
    %14 = vsyncpa [#allocation3], 0
    // Predicated region
    $region2: #{tpu_custom_call.1} parent=1 // pred_check
      _
    $region3: #{tpu_custom_call.1} parent=1 // pred_check_branch
      %16 = sbr.rel (0) target = $region5
    $region4: #{tpu_custom_call.1} parent=1 // pred_region
      _
    $region5: #{tpu_custom_call.1} parent=1 // pred_fallthru
      _
    // Predicated region
    $region6: #{tpu_custom_call.1} parent=1 // pred_check
      _
    $region7: #{tpu_custom_call.1} parent=1 // pred_check_branch
      %18 = sbr.rel (0) target = $region9
    $region8: #{tpu_custom_call.1} parent=1 // pred_region
      _
    $region9: #{tpu_custom_call.1} parent=1 // pred_fallthru
      _
    // Predicated region
    $region10: #{tpu_custom_call.1} parent=1 // pred_check
      _
    $region11: #{tpu_custom_call.1} parent=1 // pred_check_branch
      %20 = sbr.rel (0) target = $region13
    $region12: #{tpu_custom_call.1} parent=1 // pred_region
      _
    $region13: #{tpu_custom_call.1} parent=1 // pred_fallthru
      _
    // Predicated region
    $region14: #{tpu_custom_call.1} parent=1 // pred_check
      _
    $region15: #{tpu_custom_call.1} parent=1 // pred_check_branch
      %22 = sbr.rel (0) target = $region17
    $region16: #{tpu_custom_call.1} parent=1 // pred_region
      _
    $region17: #{tpu_custom_call.1} parent=1 // pred_fallthru
      _
    // Predicated region
    $region18: #{tpu_custom_call.1} parent=1 // pred_check
      _
    $region19: #{tpu_custom_call.1} parent=1 // pred_check_branch
      %24 = sbr.rel (0) target = $region21
    $region20: #{tpu_custom_call.1} parent=1 // pred_region
      _
    $region21: #{tpu_custom_call.1} parent=1 // pred_fallthru
      _
    // Predicated region
    $region22: #{tpu_custom_call.1} parent=1 // pred_check
      _
    $region23: #{tpu_custom_call.1} parent=1 // pred_check_branch
      %26 = sbr.rel (0) target = $region25
    $region24: #{tpu_custom_call.1} parent=1 // pred_region
      _
    $region25: #{tpu_custom_call.1} parent=1 // pred_fallthru
      _
    // Predicated region
    $region26: #{tpu_custom_call.1} parent=1 // pred_check
      _
    $region27: #{tpu_custom_call.1} parent=1 // pred_check_branch
      %28 = sbr.rel (0) target = $region29
    $region28: #{tpu_custom_call.1} parent=1 // pred_region
      _
    $region29: #{tpu_custom_call.1} parent=1 // pred_fallthru
      _
    %v30 = vld [vmem:[%s0] sm:$0xff]
    %v31 = vld [vmem:[%s0 + $0x8] sm:$0xff]
    %v32 = vld [vmem:[%s0 + $0x10] sm:$0xff]
    %v33 = vld [vmem:[%s2] sm:$0xf]
    %v34 = vld [vmem:[%s2 + $0x4] sm:$0xf]
    %v35 = vld [vmem:[%s2 + $0x8] sm:$0xf]
    %v36 = vld [vmem:[%s2 + $0xc] sm:$0xf]
    %v37 = vld [vmem:[%s2 + $0x10] sm:$0xf]
    %v38 = vld [vmem:[%s2 + $0x14] sm:$0xf]
    %v39 = vld [vmem:[%s2 + $0x18] sm:$0xf]
    %v40 = vld [vmem:[%s2 + $0x1c] sm:$0xf]
    %v41 = vld [vmem:[%s2 + $0x20] sm:$0xf]
    %v42 = vld [vmem:[%s2 + $0x24] sm:$0xf]
    %v43 = vld [vmem:[%s2 + $0x28] sm:$0xf]
    %v44 = vld [vmem:[%s2 + $0x2c] sm:$0xf]
    %v45 = vld [vmem:[%s2 + $0x30] sm:$0xf]
    %v46 = vld [vmem:[%s2 + $0x34] sm:$0xf]
    %v47 = vld [vmem:[%s2 + $0x38] sm:$0xf]
    %v48 = vld [vmem:[%s2 + $0x3c] sm:$0xf]
    %v49 = vld [vmem:[%s2 + $0x40] sm:$0xf]
    %v50 = vld [vmem:[%s2 + $0x44] sm:$0xf]
    %v51 = vld [vmem:[%s2 + $0x48] sm:$0xf]
    %v52 = vld [vmem:[%s2 + $0x4c] sm:$0xf]
    %v53 = vld [vmem:[%s2 + $0x50] sm:$0xf]
    %v54 = vld [vmem:[%s2 + $0x54] sm:$0xf]
    %v55 = vld [vmem:[%s2 + $0x58] sm:$0xf]
    %v56 = vld [vmem:[%s2 + $0x5c] sm:$0xf]
    %v57 = vld [vmem:[%s2 + $0x60] sm:$0xf]
    %v58 = vld [vmem:[%s2 + $0x64] sm:$0xf]
    %v59 = vld [vmem:[%s2 + $0x68] sm:$0xf]
    %v60 = vld [vmem:[%s2 + $0x6c] sm:$0xf]
    %v61 = vld [vmem:[%s2 + $0x70] sm:$0xf]
    %v62 = vld [vmem:[%s2 + $0x74] sm:$0xf]
    %v63 = vld [vmem:[%s2 + $0x78] sm:$0xf]
    %v64 = vld [vmem:[%s2 + $0x7c] sm:$0xf]
    %v65 = vld [vmem:[%s2 + $0x80] sm:$0xf]
    %v66 = vld [vmem:[%s2 + $0x84] sm:$0xf]
    %v67 = vld [vmem:[%s2 + $0x88] sm:$0xf]
    %v68 = vld [vmem:[%s2 + $0x8c] sm:$0xf]
    %v69 = vld [vmem:[%s2 + $0x90] sm:$0xf]
    %v70 = vld [vmem:[%s2 + $0x94] sm:$0xf]
    %v71 = vld [vmem:[%s2 + $0x98] sm:$0xf]
    %v72 = vld [vmem:[%s2 + $0x9c] sm:$0xf]
    %v73 = vld [vmem:[%s2 + $0xa0] sm:$0xf]
    %v74 = vld [vmem:[%s2 + $0xa4] sm:$0xf]
    %v75 = vld [vmem:[%s2 + $0xa8] sm:$0xf]
    %v76 = vld [vmem:[%s2 + $0xac] sm:$0xf]
    %v77 = vld [vmem:[%s2 + $0xb0] sm:$0xf]
    %v78 = vld [vmem:[%s2 + $0xb4] sm:$0xf]
    %v79 = vld [vmem:[%s2 + $0xb8] sm:$0xf]
    %v80 = vld [vmem:[%s2 + $0xbc] sm:$0xf]
    %v81 = vld [vmem:[%s2 + $0xc0] sm:$0xf]
    %v82 = vld [vmem:[%s2 + $0xc4] sm:$0xf]
    %v83 = vld [vmem:[%s2 + $0xc8] sm:$0xf]
    %v84 = vld [vmem:[%s2 + $0xcc] sm:$0xf]
    %v85 = vld [vmem:[%s2 + $0xd0] sm:$0xf]
    %v86 = vld [vmem:[%s2 + $0xd4] sm:$0xf]
    %v87 = vld [vmem:[%s2 + $0xd8] sm:$0xf]
    %v88 = vld [vmem:[%s2 + $0xdc] sm:$0xf]
    %v89 = vld [vmem:[%s2 + $0xe0] sm:$0xf]
    %v90 = vld [vmem:[%s2 + $0xe4] sm:$0xf]
    %v91 = vld [vmem:[%s2 + $0xe8] sm:$0xf]
    %v92 = vld [vmem:[%s2 + $0xec] sm:$0xf]
    %v93 = vld [vmem:[%s2 + $0xf0] sm:$0xf]
    %v94 = vld [vmem:[%s2 + $0xf4] sm:$0xf]
    %v95 = vld [vmem:[%s2 + $0xf8] sm:$0xf]
    %v96 = vld [vmem:[%s2 + $0xfc] sm:$0xf]
    %v97 = vld [vmem:[%s2 + $0x100] sm:$0xf]
    %v98 = vld [vmem:[%s2 + $0x104] sm:$0xf]
    %v99 = vld [vmem:[%s2 + $0x108] sm:$0xf]
    %v100 = vld [vmem:[%s2 + $0x10c] sm:$0xf]
    %v101 = vld [vmem:[%s2 + $0x110] sm:$0xf]
    %v102 = vld [vmem:[%s2 + $0x114] sm:$0xf]
    %v103 = vld [vmem:[%s2 + $0x118] sm:$0xf]
    %v104 = vld [vmem:[%s2 + $0x11c] sm:$0xf]
    %v105 = vld [vmem:[%s2 + $0x120] sm:$0xf]
    %v106 = vld [vmem:[%s2 + $0x124] sm:$0xf]
    %v107 = vld [vmem:[%s2 + $0x128] sm:$0xf]
    %v108 = vld [vmem:[%s2 + $0x12c] sm:$0xf]
    %v109 = vld [vmem:[%s2 + $0x130] sm:$0xf]
    %v110 = vld [vmem:[%s2 + $0x134] sm:$0xf]
    %v111 = vld [vmem:[%s2 + $0x138] sm:$0xf]
    %v112 = vld [vmem:[%s2 + $0x13c] sm:$0xf]
    %v113 = vld [vmem:[%s2 + $0x140] sm:$0xf]
    %v114 = vld [vmem:[%s2 + $0x144] sm:$0xf]
    %v115 = vld [vmem:[%s2 + $0x148] sm:$0xf]
    %v116 = vld [vmem:[%s2 + $0x14c] sm:$0xf]
    %v117 = vld [vmem:[%s2 + $0x150] sm:$0xf]
    %v118 = vld [vmem:[%s2 + $0x154] sm:$0xf]
    %v119 = vld [vmem:[%s2 + $0x158] sm:$0xf]
    %v120 = vld [vmem:[%s2 + $0x15c] sm:$0xf]
    %v121 = vld [vmem:[%s2 + $0x160] sm:$0xf]
    %v122 = vld [vmem:[%s2 + $0x164] sm:$0xf]
    %v123 = vld [vmem:[%s2 + $0x168] sm:$0xf]
    %v124 = vld [vmem:[%s2 + $0x16c] sm:$0xf]
    %v125 = vld [vmem:[%s2 + $0x170] sm:$0xf]
    %v126 = vld [vmem:[%s2 + $0x174] sm:$0xf]
    %v127 = vld [vmem:[%s2 + $0x178] sm:$0xf]
    %v128 = vld [vmem:[%s2 + $0x17c] sm:$0xf]
    %v129 = vld [vmem:[%s4] sm:$0x1]
    %v131 = vlaneseq
    %v132 = vshrl.u32 %v131, 7
    %v133 = vsub.s32 0, %v132
    %v134 = vrot.slane %v129, %v133
    %v139 = vunpack.c.l.b16 %v30
    %v140 = vunpack.c.h.b16 %v30
    %v141 = vunpack.c.l.b16 %v31
    %v142 = vunpack.c.h.b16 %v31
    %v143 = vunpack.c.l.b16 %v32
    %v144 = vunpack.c.h.b16 %v32
    %v145 = vpack.c.b16 %v139, %v139
    %v146 = vpack.c.b16 %v140, %v140
    %v147 = vpack.c.b16 %v141, %v141
    %v148 = vpack.c.b16 %v142, %v142
    %v149 = vpack.c.b16 %v143, %v143
    %v150 = vpack.c.b16 %v144, %v144
    %v253 = vunpack.c.l.b16 %v33
    %v254 = vunpack.c.l.b16 %v34
    %v255 = vunpack.c.l.b16 %v35
    %v256 = vunpack.c.l.b16 %v36
    %v257 = vunpack.c.l.b16 %v37
    %v258 = vunpack.c.l.b16 %v38
    %v259 = vunpack.c.l.b16 %v39
    %v260 = vunpack.c.l.b16 %v40
    %v261 = vunpack.c.l.b16 %v41
    %v262 = vunpack.c.l.b16 %v42
    %v263 = vunpack.c.l.b16 %v43
    %v264 = vunpack.c.l.b16 %v44
    %v265 = vunpack.c.l.b16 %v45
    %v266 = vunpack.c.l.b16 %v46
    %v267 = vunpack.c.l.b16 %v47
    %v268 = vunpack.c.l.b16 %v48
    %v269 = vunpack.c.l.b16 %v49
    %v270 = vunpack.c.l.b16 %v50
    %v271 = vunpack.c.l.b16 %v51
    %v272 = vunpack.c.l.b16 %v52
    %v273 = vunpack.c.l.b16 %v53
    %v274 = vunpack.c.l.b16 %v54
    %v275 = vunpack.c.l.b16 %v55
    %v276 = vunpack.c.l.b16 %v56
    %v277 = vunpack.c.l.b16 %v57
    %v278 = vunpack.c.l.b16 %v58
    %v279 = vunpack.c.l.b16 %v59
    %v280 = vunpack.c.l.b16 %v60
    %v281 = vunpack.c.l.b16 %v61
    %v282 = vunpack.c.l.b16 %v62
    %v283 = vunpack.c.l.b16 %v63
    %v284 = vunpack.c.l.b16 %v64
    %v285 = vunpack.c.l.b16 %v65
    %v286 = vunpack.c.l.b16 %v66
    %v287 = vunpack.c.l.b16 %v67
    %v288 = vunpack.c.l.b16 %v68
    %v289 = vunpack.c.l.b16 %v69
    %v290 = vunpack.c.l.b16 %v70
    %v291 = vunpack.c.l.b16 %v71
    %v292 = vunpack.c.l.b16 %v72
    %v293 = vunpack.c.l.b16 %v73
    %v294 = vunpack.c.l.b16 %v74
    %v295 = vunpack.c.l.b16 %v75
    %v296 = vunpack.c.l.b16 %v76
    %v297 = vunpack.c.l.b16 %v77
    %v298 = vunpack.c.l.b16 %v78
    %v299 = vunpack.c.l.b16 %v79
    %v300 = vunpack.c.l.b16 %v80
    %v301 = vunpack.c.l.b16 %v81
    %v302 = vunpack.c.l.b16 %v82
    %v303 = vunpack.c.l.b16 %v83
    %v304 = vunpack.c.l.b16 %v84
    %v305 = vunpack.c.l.b16 %v85
    %v306 = vunpack.c.l.b16 %v86
    %v307 = vunpack.c.l.b16 %v87
    %v308 = vunpack.c.l.b16 %v88
    %v309 = vunpack.c.l.b16 %v89
    %v310 = vunpack.c.l.b16 %v90
    %v311 = vunpack.c.l.b16 %v91
    %v312 = vunpack.c.l.b16 %v92
    %v313 = vunpack.c.l.b16 %v93
    %v314 = vunpack.c.l.b16 %v94
    %v315 = vunpack.c.l.b16 %v95
    %v316 = vunpack.c.l.b16 %v96
    %v317 = vunpack.c.l.b16 %v97
    %v318 = vunpack.c.l.b16 %v98
    %v319 = vunpack.c.l.b16 %v99
    %v320 = vunpack.c.l.b16 %v100
    %v321 = vunpack.c.l.b16 %v101
    %v322 = vunpack.c.l.b16 %v102
    %v323 = vunpack.c.l.b16 %v103
    %v324 = vunpack.c.l.b16 %v104
    %v325 = vunpack.c.l.b16 %v105
    %v326 = vunpack.c.l.b16 %v106
    %v327 = vunpack.c.l.b16 %v107
    %v328 = vunpack.c.l.b16 %v108
    %v329 = vunpack.c.l.b16 %v109
    %v330 = vunpack.c.l.b16 %v110
    %v331 = vunpack.c.l.b16 %v111
    %v332 = vunpack.c.l.b16 %v112
    %v333 = vunpack.c.l.b16 %v113
    %v334 = vunpack.c.l.b16 %v114
    %v335 = vunpack.c.l.b16 %v115
    %v336 = vunpack.c.l.b16 %v116
    %v337 = vunpack.c.l.b16 %v117
    %v338 = vunpack.c.l.b16 %v118
    %v339 = vunpack.c.l.b16 %v119
    %v340 = vunpack.c.l.b16 %v120
    %v341 = vunpack.c.l.b16 %v121
    %v342 = vunpack.c.l.b16 %v122
    %v343 = vunpack.c.l.b16 %v123
    %v344 = vunpack.c.l.b16 %v124
    %v345 = vunpack.c.l.b16 %v125
    %v346 = vunpack.c.l.b16 %v126
    %v347 = vunpack.c.l.b16 %v127
    %v348 = vunpack.c.l.b16 %v128
    %v349 = vpack.c.b16 %v254, %v253
    %v350 = vpack.c.b16 %v256, %v255
    %v351 = vpack.c.b16 %v258, %v257
    %v352 = vpack.c.b16 %v260, %v259
    %v353 = vpack.c.b16 %v262, %v261
    %v354 = vpack.c.b16 %v264, %v263
    %v355 = vpack.c.b16 %v266, %v265
    %v356 = vpack.c.b16 %v268, %v267
    %v357 = vpack.c.b16 %v270, %v269
    %v358 = vpack.c.b16 %v272, %v271
    %v359 = vpack.c.b16 %v274, %v273
    %v360 = vpack.c.b16 %v276, %v275
    %v361 = vpack.c.b16 %v278, %v277
    %v362 = vpack.c.b16 %v280, %v279
    %v363 = vpack.c.b16 %v282, %v281
    %v364 = vpack.c.b16 %v284, %v283
    %v365 = vpack.c.b16 %v286, %v285
    %v366 = vpack.c.b16 %v288, %v287
    %v367 = vpack.c.b16 %v290, %v289
    %v368 = vpack.c.b16 %v292, %v291
    %v369 = vpack.c.b16 %v294, %v293
    %v370 = vpack.c.b16 %v296, %v295
    %v371 = vpack.c.b16 %v298, %v297
    %v372 = vpack.c.b16 %v300, %v299
    %v373 = vpack.c.b16 %v302, %v301
    %v374 = vpack.c.b16 %v304, %v303
    %v375 = vpack.c.b16 %v306, %v305
    %v376 = vpack.c.b16 %v308, %v307
    %v377 = vpack.c.b16 %v310, %v309
    %v378 = vpack.c.b16 %v312, %v311
    %v379 = vpack.c.b16 %v314, %v313
    %v380 = vpack.c.b16 %v316, %v315
    %v381 = vpack.c.b16 %v318, %v317
    %v382 = vpack.c.b16 %v320, %v319
    %v383 = vpack.c.b16 %v322, %v321
    %v384 = vpack.c.b16 %v324, %v323
    %v385 = vpack.c.b16 %v326, %v325
    %v386 = vpack.c.b16 %v328, %v327
    %v387 = vpack.c.b16 %v330, %v329
    %v388 = vpack.c.b16 %v332, %v331
    %v389 = vpack.c.b16 %v334, %v333
    %v390 = vpack.c.b16 %v336, %v335
    %v391 = vpack.c.b16 %v338, %v337
    %v392 = vpack.c.b16 %v340, %v339
    %v393 = vpack.c.b16 %v342, %v341
    %v394 = vpack.c.b16 %v344, %v343
    %v395 = vpack.c.b16 %v346, %v345
    %v396 = vpack.c.b16 %v348, %v347
    %445 = vmatprep.subr.bf16.mxu0 0
    %446 = vmatpush1.bf16.msra.mxu0 %v349
    %447 = vmatprep.subr.bf16.mxu0 0
    %448 = vmatpush1.bf16.msra.mxu0 %v350
    %449 = vmatprep.subr.bf16.mxu0 0
    %450 = vmatpush1.bf16.msra.mxu0 %v351
    %451 = vmatprep.subr.bf16.mxu0 0
    %452 = vmatpush1.bf16.msra.mxu0 %v352
    %453 = vmatprep.subr.bf16.mxu0 0
    %454 = vmatpush1.bf16.msra.mxu0 %v353
    %455 = vmatprep.subr.bf16.mxu0 0
    %456 = vmatpush1.bf16.msra.mxu0 %v354
    %457 = vmatprep.subr.bf16.mxu0 0
    %458 = vmatpush1.bf16.msra.mxu0 %v355
    %459 = vmatprep.subr.bf16.mxu0 0
    %460 = vmatpush1.bf16.msra.mxu0 %v356
    %461 = vmatprep.subr.bf16.mxu0 0
    %462 = vmatpush1.bf16.msra.mxu0 %v357
    %463 = vmatprep.subr.bf16.mxu0 0
    %464 = vmatpush1.bf16.msra.mxu0 %v358
    %465 = vmatprep.subr.bf16.mxu0 0
    %466 = vmatpush1.bf16.msra.mxu0 %v359
    %467 = vmatprep.subr.bf16.mxu0 0
    %468 = vmatpush1.bf16.msra.mxu0 %v360
    %469 = vmatprep.subr.bf16.mxu0 0
    %470 = vmatpush1.bf16.msra.mxu0 %v361
    %471 = vmatprep.subr.bf16.mxu0 0
    %472 = vmatpush1.bf16.msra.mxu0 %v362
    %473 = vmatprep.subr.bf16.mxu0 0
    %474 = vmatpush1.bf16.msra.mxu0 %v363
    %475 = vmatprep.subr.bf16.mxu0 0
    %476 = vmatpush1.bf16.msra.mxu0 %v364
    %477 = vmatprep.mubr.bf16.mxu0 %v146
    %478 = vmatmul.mubr.bf16.gmra.mrb[0].mxu0 %v145
    %v479 = vpop.f32.mrb[0].mxu0
    %v480 = vadd.f32 %v134, %v479
    %v481 = vpop.f32.mrb[0].mxu0
    %v482 = vpop.f32.mrb[0].mxu0
    %v483 = vpop.f32.mrb[0].mxu0
    %484 = vdwg.mxu0
    %485 = vmatprep.subr.bf16.mxu0 0
    %486 = vmatpush1.bf16.msra.mxu0 %v365
    %487 = vmatprep.subr.bf16.mxu0 0
    %488 = vmatpush1.bf16.msra.mxu0 %v366
    %489 = vmatprep.subr.bf16.mxu0 0
    %490 = vmatpush1.bf16.msra.mxu0 %v367
    %491 = vmatprep.subr.bf16.mxu0 0
    %492 = vmatpush1.bf16.msra.mxu0 %v368
    %493 = vmatprep.subr.bf16.mxu0 0
    %494 = vmatpush1.bf16.msra.mxu0 %v369
    %495 = vmatprep.subr.bf16.mxu0 0
    %496 = vmatpush1.bf16.msra.mxu0 %v370
    %497 = vmatprep.subr.bf16.mxu0 0
    %498 = vmatpush1.bf16.msra.mxu0 %v371
    %499 = vmatprep.subr.bf16.mxu0 0
    %500 = vmatpush1.bf16.msra.mxu0 %v372
    %501 = vmatprep.subr.bf16.mxu0 0
    %502 = vmatpush1.bf16.msra.mxu0 %v373
    %503 = vmatprep.subr.bf16.mxu0 0
    %504 = vmatpush1.bf16.msra.mxu0 %v374
    %505 = vmatprep.subr.bf16.mxu0 0
    %506 = vmatpush1.bf16.msra.mxu0 %v375
    %507 = vmatprep.subr.bf16.mxu0 0
    %508 = vmatpush1.bf16.msra.mxu0 %v376
    %509 = vmatprep.subr.bf16.mxu0 0
    %510 = vmatpush1.bf16.msra.mxu0 %v377
    %511 = vmatprep.subr.bf16.mxu0 0
    %512 = vmatpush1.bf16.msra.mxu0 %v378
    %513 = vmatprep.subr.bf16.mxu0 0
    %514 = vmatpush1.bf16.msra.mxu0 %v379
    %515 = vmatprep.subr.bf16.mxu0 0
    %516 = vmatpush1.bf16.msra.mxu0 %v380
    %517 = vmatprep.mubr.bf16.mxu0 %v148
    %518 = vmatmul.mubr.bf16.gmra.mrb[0].mxu0 %v147
    %v519 = vpop.f32.mrb[0].mxu0
    %v520 = vadd.f32 %v480, %v519
    %v521 = vpop.f32.mrb[0].mxu0
    %v522 = vpop.f32.mrb[0].mxu0
    %v523 = vpop.f32.mrb[0].mxu0
    %524 = vdwg.mxu0
    %525 = vmatprep.subr.bf16.mxu0 0
    %526 = vmatpush1.bf16.msra.mxu0 %v381
    %527 = vmatprep.subr.bf16.mxu0 0
    %528 = vmatpush1.bf16.msra.mxu0 %v382
    %529 = vmatprep.subr.bf16.mxu0 0
    %530 = vmatpush1.bf16.msra.mxu0 %v383
    %531 = vmatprep.subr.bf16.mxu0 0
    %532 = vmatpush1.bf16.msra.mxu0 %v384
    %533 = vmatprep.subr.bf16.mxu0 0
    %534 = vmatpush1.bf16.msra.mxu0 %v385
    %535 = vmatprep.subr.bf16.mxu0 0
    %536 = vmatpush1.bf16.msra.mxu0 %v386
    %537 = vmatprep.subr.bf16.mxu0 0
    %538 = vmatpush1.bf16.msra.mxu0 %v387
    %539 = vmatprep.subr.bf16.mxu0 0
    %540 = vmatpush1.bf16.msra.mxu0 %v388
    %541 = vmatprep.subr.bf16.mxu0 0
    %542 = vmatpush1.bf16.msra.mxu0 %v389
    %543 = vmatprep.subr.bf16.mxu0 0
    %544 = vmatpush1.bf16.msra.mxu0 %v390
    %545 = vmatprep.subr.bf16.mxu0 0
    %546 = vmatpush1.bf16.msra.mxu0 %v391
    %547 = vmatprep.subr.bf16.mxu0 0
    %548 = vmatpush1.bf16.msra.mxu0 %v392
    %549 = vmatprep.subr.bf16.mxu0 0
    %550 = vmatpush1.bf16.msra.mxu0 %v393
    %551 = vmatprep.subr.bf16.mxu0 0
    %552 = vmatpush1.bf16.msra.mxu0 %v394
    %553 = vmatprep.subr.bf16.mxu0 0
    %554 = vmatpush1.bf16.msra.mxu0 %v395
    %555 = vmatprep.subr.bf16.mxu0 0
    %556 = vmatpush1.bf16.msra.mxu0 %v396
    %557 = vmatprep.mubr.bf16.mxu0 %v150
    %558 = vmatmul.mubr.bf16.gmra.mrb[0].mxu0 %v149
    %v559 = vpop.f32.mrb[0].mxu0
    %v560 = vadd.f32 %v520, %v559
    %v561 = vpop.f32.mrb[0].mxu0
    %v562 = vpop.f32.mrb[0].mxu0
    %v563 = vpop.f32.mrb[0].mxu0
    %564 = vdwg.mxu0
    %v565 = vld [vmem:[%s1] sm:$0xff]
    %v566 = vld [vmem:[%s1 + $0x8] sm:$0xff]
    %v567 = vld [vmem:[%s1 + $0x10] sm:$0xff]
    %v568 = vld [vmem:[%s1 + $0x18] sm:$0xff]
    %v569 = vld [vmem:[%s1 + $0x20] sm:$0xff]
    %v570 = vld [vmem:[%s1 + $0x28] sm:$0xff]
    %v571 = vld [vmem:[%s1 + $0x30] sm:$0xff]
    %v572 = vld [vmem:[%s1 + $0x38] sm:$0xf]
    %v573 = vld [vmem:[%s3] sm:$0xf]
    %v574 = vld [vmem:[%s3 + $0x4] sm:$0xf]
    %v575 = vld [vmem:[%s3 + $0x8] sm:$0xf]
    %v576 = vld [vmem:[%s3 + $0xc] sm:$0xf]
    %v577 = vld [vmem:[%s3 + $0x10] sm:$0xf]
    %v578 = vld [vmem:[%s3 + $0x14] sm:$0xf]
    %v579 = vld [vmem:[%s3 + $0x18] sm:$0xf]
    %v580 = vld [vmem:[%s3 + $0x1c] sm:$0xf]
    %v581 = vld [vmem:[%s3 + $0x20] sm:$0xf]
    %v582 = vld [vmem:[%s3 + $0x24] sm:$0xf]
    %v583 = vld [vmem:[%s3 + $0x28] sm:$0xf]
    %v584 = vld [vmem:[%s3 + $0x2c] sm:$0xf]
    %v585 = vld [vmem:[%s3 + $0x30] sm:$0xf]
    %v586 = vld [vmem:[%s3 + $0x34] sm:$0xf]
    %v587 = vld [vmem:[%s3 + $0x38] sm:$0xf]
    %v588 = vld [vmem:[%s3 + $0x3c] sm:$0xf]
    %v589 = vld [vmem:[%s3 + $0x40] sm:$0xf]
    %v590 = vld [vmem:[%s3 + $0x44] sm:$0xf]
    %v591 = vld [vmem:[%s3 + $0x48] sm:$0xf]
    %v592 = vld [vmem:[%s3 + $0x4c] sm:$0xf]
    %v593 = vld [vmem:[%s3 + $0x50] sm:$0xf]
    %v594 = vld [vmem:[%s3 + $0x54] sm:$0xf]
    %v595 = vld [vmem:[%s3 + $0x58] sm:$0xf]
    %v596 = vld [vmem:[%s3 + $0x5c] sm:$0xf]
    %v597 = vld [vmem:[%s3 + $0x60] sm:$0xf]
    %v598 = vld [vmem:[%s3 + $0x64] sm:$0xf]
    %v599 = vld [vmem:[%s3 + $0x68] sm:$0xf]
    %v600 = vld [vmem:[%s3 + $0x6c] sm:$0xf]
    %v601 = vld [vmem:[%s3 + $0x70] sm:$0xf]
    %v602 = vld [vmem:[%s3 + $0x74] sm:$0xf]
    %v603 = vld [vmem:[%s3 + $0x78] sm:$0xf]
    %v604 = vld [vmem:[%s3 + $0x7c] sm:$0xf]
    %v605 = vld [vmem:[%s3 + $0x80] sm:$0xf]
    %v606 = vld [vmem:[%s3 + $0x84] sm:$0xf]
    %v607 = vld [vmem:[%s3 + $0x88] sm:$0xf]
    %v608 = vld [vmem:[%s3 + $0x8c] sm:$0xf]
    %v609 = vld [vmem:[%s3 + $0x90] sm:$0xf]
    %v610 = vld [vmem:[%s3 + $0x94] sm:$0xf]
    %v611 = vld [vmem:[%s3 + $0x98] sm:$0xf]
    %v612 = vld [vmem:[%s3 + $0x9c] sm:$0xf]
    %v613 = vld [vmem:[%s3 + $0xa0] sm:$0xf]
    %v614 = vld [vmem:[%s3 + $0xa4] sm:$0xf]
    %v615 = vld [vmem:[%s3 + $0xa8] sm:$0xf]
    %v616 = vld [vmem:[%s3 + $0xac] sm:$0xf]
    %v617 = vld [vmem:[%s3 + $0xb0] sm:$0xf]
    %v618 = vld [vmem:[%s3 + $0xb4] sm:$0xf]
    %v619 = vld [vmem:[%s3 + $0xb8] sm:$0xf]
    %v620 = vld [vmem:[%s3 + $0xbc] sm:$0xf]
    %v621 = vld [vmem:[%s3 + $0xc0] sm:$0xf]
    %v622 = vld [vmem:[%s3 + $0xc4] sm:$0xf]
    %v623 = vld [vmem:[%s3 + $0xc8] sm:$0xf]
    %v624 = vld [vmem:[%s3 + $0xcc] sm:$0xf]
    %v625 = vld [vmem:[%s3 + $0xd0] sm:$0xf]
    %v626 = vld [vmem:[%s3 + $0xd4] sm:$0xf]
    %v627 = vld [vmem:[%s3 + $0xd8] sm:$0xf]
    %v628 = vld [vmem:[%s3 + $0xdc] sm:$0xf]
    %v629 = vld [vmem:[%s3 + $0xe0] sm:$0xf]
    %v630 = vld [vmem:[%s3 + $0xe4] sm:$0xf]
    %v631 = vld [vmem:[%s3 + $0xe8] sm:$0xf]
    %v632 = vld [vmem:[%s3 + $0xec] sm:$0xf]
    %v633 = vld [vmem:[%s3 + $0xf0] sm:$0xf]
    %v634 = vld [vmem:[%s3 + $0xf4] sm:$0xf]
    %v635 = vld [vmem:[%s3 + $0xf8] sm:$0xf]
    %v636 = vld [vmem:[%s3 + $0xfc] sm:$0xf]
    %v637 = vld [vmem:[%s3 + $0x100] sm:$0xf]
    %v638 = vld [vmem:[%s3 + $0x104] sm:$0xf]
    %v639 = vld [vmem:[%s3 + $0x108] sm:$0xf]
    %v640 = vld [vmem:[%s3 + $0x10c] sm:$0xf]
    %v641 = vld [vmem:[%s3 + $0x110] sm:$0xf]
    %v642 = vld [vmem:[%s3 + $0x114] sm:$0xf]
    %v643 = vld [vmem:[%s3 + $0x118] sm:$0xf]
    %v644 = vld [vmem:[%s3 + $0x11c] sm:$0xf]
    %v645 = vld [vmem:[%s3 + $0x120] sm:$0xf]
    %v646 = vld [vmem:[%s3 + $0x124] sm:$0xf]
    %v647 = vld [vmem:[%s3 + $0x128] sm:$0xf]
    %v648 = vld [vmem:[%s3 + $0x12c] sm:$0xf]
    %v649 = vld [vmem:[%s3 + $0x130] sm:$0xf]
    %v650 = vld [vmem:[%s3 + $0x134] sm:$0xf]
    %v651 = vld [vmem:[%s3 + $0x138] sm:$0xf]
    %v652 = vld [vmem:[%s3 + $0x13c] sm:$0xf]
    %v653 = vld [vmem:[%s3 + $0x140] sm:$0xf]
    %v654 = vld [vmem:[%s3 + $0x144] sm:$0xf]
    %v655 = vld [vmem:[%s3 + $0x148] sm:$0xf]
    %v656 = vld [vmem:[%s3 + $0x14c] sm:$0xf]
    %v657 = vld [vmem:[%s3 + $0x150] sm:$0xf]
    %v658 = vld [vmem:[%s3 + $0x154] sm:$0xf]
    %v659 = vld [vmem:[%s3 + $0x158] sm:$0xf]
    %v660 = vld [vmem:[%s3 + $0x15c] sm:$0xf]
    %v661 = vld [vmem:[%s3 + $0x160] sm:$0xf]
    %v662 = vld [vmem:[%s3 + $0x164] sm:$0xf]
    %v663 = vld [vmem:[%s3 + $0x168] sm:$0xf]
    %v664 = vld [vmem:[%s3 + $0x16c] sm:$0xf]
    %v665 = vld [vmem:[%s3 + $0x170] sm:$0xf]
    %v666 = vld [vmem:[%s3 + $0x174] sm:$0xf]
    %v667 = vld [vmem:[%s3 + $0x178] sm:$0xf]
    %v668 = vld [vmem:[%s3 + $0x17c] sm:$0xf]
    %v669 = vld [vmem:[%s3 + $0x180] sm:$0xf]
    %v670 = vld [vmem:[%s3 + $0x184] sm:$0xf]
    %v671 = vld [vmem:[%s3 + $0x188] sm:$0xf]
    %v672 = vld [vmem:[%s3 + $0x18c] sm:$0xf]
    %v673 = vld [vmem:[%s3 + $0x190] sm:$0xf]
    %v674 = vld [vmem:[%s3 + $0x194] sm:$0xf]
    %v675 = vld [vmem:[%s3 + $0x198] sm:$0xf]
    %v676 = vld [vmem:[%s3 + $0x19c] sm:$0xf]
    %v677 = vld [vmem:[%s3 + $0x1a0] sm:$0xf]
    %v678 = vld [vmem:[%s3 + $0x1a4] sm:$0xf]
    %v679 = vld [vmem:[%s3 + $0x1a8] sm:$0xf]
    %v680 = vld [vmem:[%s3 + $0x1ac] sm:$0xf]
    %v681 = vld [vmem:[%s3 + $0x1b0] sm:$0xf]
    %v682 = vld [vmem:[%s3 + $0x1b4] sm:$0xf]
    %v683 = vld [vmem:[%s3 + $0x1b8] sm:$0xf]
    %v684 = vld [vmem:[%s3 + $0x1bc] sm:$0xf]
    %v685 = vld [vmem:[%s3 + $0x1c0] sm:$0xf]
    %v686 = vld [vmem:[%s3 + $0x1c4] sm:$0xf]
    %v687 = vld [vmem:[%s3 + $0x1c8] sm:$0xf]
    %v688 = vld [vmem:[%s3 + $0x1cc] sm:$0xf]
    %v689 = vld [vmem:[%s3 + $0x1d0] sm:$0xf]
    %v690 = vld [vmem:[%s3 + $0x1d4] sm:$0xf]
    %v691 = vld [vmem:[%s3 + $0x1d8] sm:$0xf]
    %v692 = vld [vmem:[%s3 + $0x1dc] sm:$0xf]
    %v693 = vld [vmem:[%s3 + $0x1e0] sm:$0xf]
    %v694 = vld [vmem:[%s3 + $0x1e4] sm:$0xf]
    %v695 = vld [vmem:[%s3 + $0x1e8] sm:$0xf]
    %v696 = vld [vmem:[%s3 + $0x1ec] sm:$0xf]
    %v697 = vld [vmem:[%s3 + $0x1f0] sm:$0xf]
    %v698 = vld [vmem:[%s3 + $0x1f4] sm:$0xf]
    %v699 = vld [vmem:[%s3 + $0x1f8] sm:$0xf]
    %v700 = vld [vmem:[%s3 + $0x1fc] sm:$0xf]
    %v701 = vld [vmem:[%s3 + $0x200] sm:$0xf]
    %v702 = vld [vmem:[%s3 + $0x204] sm:$0xf]
    %v703 = vld [vmem:[%s3 + $0x208] sm:$0xf]
    %v704 = vld [vmem:[%s3 + $0x20c] sm:$0xf]
    %v705 = vld [vmem:[%s3 + $0x210] sm:$0xf]
    %v706 = vld [vmem:[%s3 + $0x214] sm:$0xf]
    %v707 = vld [vmem:[%s3 + $0x218] sm:$0xf]
    %v708 = vld [vmem:[%s3 + $0x21c] sm:$0xf]
    %v709 = vld [vmem:[%s3 + $0x220] sm:$0xf]
    %v710 = vld [vmem:[%s3 + $0x224] sm:$0xf]
    %v711 = vld [vmem:[%s3 + $0x228] sm:$0xf]
    %v712 = vld [vmem:[%s3 + $0x22c] sm:$0xf]
    %v713 = vld [vmem:[%s3 + $0x230] sm:$0xf]
    %v714 = vld [vmem:[%s3 + $0x234] sm:$0xf]
    %v715 = vld [vmem:[%s3 + $0x238] sm:$0xf]
    %v716 = vld [vmem:[%s3 + $0x23c] sm:$0xf]
    %v717 = vld [vmem:[%s3 + $0x240] sm:$0xf]
    %v718 = vld [vmem:[%s3 + $0x244] sm:$0xf]
    %v719 = vld [vmem:[%s3 + $0x248] sm:$0xf]
    %v720 = vld [vmem:[%s3 + $0x24c] sm:$0xf]
    %v721 = vld [vmem:[%s3 + $0x250] sm:$0xf]
    %v722 = vld [vmem:[%s3 + $0x254] sm:$0xf]
    %v723 = vld [vmem:[%s3 + $0x258] sm:$0xf]
    %v724 = vld [vmem:[%s3 + $0x25c] sm:$0xf]
    %v725 = vld [vmem:[%s3 + $0x260] sm:$0xf]
    %v726 = vld [vmem:[%s3 + $0x264] sm:$0xf]
    %v727 = vld [vmem:[%s3 + $0x268] sm:$0xf]
    %v728 = vld [vmem:[%s3 + $0x26c] sm:$0xf]
    %v729 = vld [vmem:[%s3 + $0x270] sm:$0xf]
    %v730 = vld [vmem:[%s3 + $0x274] sm:$0xf]
    %v731 = vld [vmem:[%s3 + $0x278] sm:$0xf]
    %v732 = vld [vmem:[%s3 + $0x27c] sm:$0xf]
    %v733 = vld [vmem:[%s3 + $0x280] sm:$0xf]
    %v734 = vld [vmem:[%s3 + $0x284] sm:$0xf]
    %v735 = vld [vmem:[%s3 + $0x288] sm:$0xf]
    %v736 = vld [vmem:[%s3 + $0x28c] sm:$0xf]
    %v737 = vld [vmem:[%s3 + $0x290] sm:$0xf]
    %v738 = vld [vmem:[%s3 + $0x294] sm:$0xf]
    %v739 = vld [vmem:[%s3 + $0x298] sm:$0xf]
    %v740 = vld [vmem:[%s3 + $0x29c] sm:$0xf]
    %v741 = vld [vmem:[%s3 + $0x2a0] sm:$0xf]
    %v742 = vld [vmem:[%s3 + $0x2a4] sm:$0xf]
    %v743 = vld [vmem:[%s3 + $0x2a8] sm:$0xf]
    %v744 = vld [vmem:[%s3 + $0x2ac] sm:$0xf]
    %v745 = vld [vmem:[%s3 + $0x2b0] sm:$0xf]
    %v746 = vld [vmem:[%s3 + $0x2b4] sm:$0xf]
    %v747 = vld [vmem:[%s3 + $0x2b8] sm:$0xf]
    %v748 = vld [vmem:[%s3 + $0x2bc] sm:$0xf]
    %v749 = vld [vmem:[%s3 + $0x2c0] sm:$0xf]
    %v750 = vld [vmem:[%s3 + $0x2c4] sm:$0xf]
    %v751 = vld [vmem:[%s3 + $0x2c8] sm:$0xf]
    %v752 = vld [vmem:[%s3 + $0x2cc] sm:$0xf]
    %v753 = vld [vmem:[%s3 + $0x2d0] sm:$0xf]
    %v754 = vld [vmem:[%s3 + $0x2d4] sm:$0xf]
    %v755 = vld [vmem:[%s3 + $0x2d8] sm:$0xf]
    %v756 = vld [vmem:[%s3 + $0x2dc] sm:$0xf]
    %v757 = vld [vmem:[%s3 + $0x2e0] sm:$0xf]
    %v758 = vld [vmem:[%s3 + $0x2e4] sm:$0xf]
    %v759 = vld [vmem:[%s3 + $0x2e8] sm:$0xf]
    %v760 = vld [vmem:[%s3 + $0x2ec] sm:$0xf]
    %v761 = vld [vmem:[%s3 + $0x2f0] sm:$0xf]
    %v762 = vld [vmem:[%s3 + $0x2f4] sm:$0xf]
    %v763 = vld [vmem:[%s3 + $0x2f8] sm:$0xf]
    %v764 = vld [vmem:[%s3 + $0x2fc] sm:$0xf]
    %v765 = vld [vmem:[%s3 + $0x300] sm:$0xf]
    %v766 = vld [vmem:[%s3 + $0x304] sm:$0xf]
    %v767 = vld [vmem:[%s3 + $0x308] sm:$0xf]
    %v768 = vld [vmem:[%s3 + $0x30c] sm:$0xf]
    %v769 = vld [vmem:[%s3 + $0x310] sm:$0xf]
    %v770 = vld [vmem:[%s3 + $0x314] sm:$0xf]
    %v771 = vld [vmem:[%s3 + $0x318] sm:$0xf]
    %v772 = vld [vmem:[%s3 + $0x31c] sm:$0xf]
    %v773 = vld [vmem:[%s3 + $0x320] sm:$0xf]
    %v774 = vld [vmem:[%s3 + $0x324] sm:$0xf]
    %v775 = vld [vmem:[%s3 + $0x328] sm:$0xf]
    %v776 = vld [vmem:[%s3 + $0x32c] sm:$0xf]
    %v777 = vld [vmem:[%s3 + $0x330] sm:$0xf]
    %v778 = vld [vmem:[%s3 + $0x334] sm:$0xf]
    %v779 = vld [vmem:[%s3 + $0x338] sm:$0xf]
    %v780 = vld [vmem:[%s3 + $0x33c] sm:$0xf]
    %v781 = vld [vmem:[%s3 + $0x340] sm:$0xf]
    %v782 = vld [vmem:[%s3 + $0x344] sm:$0xf]
    %v783 = vld [vmem:[%s3 + $0x348] sm:$0xf]
    %v784 = vld [vmem:[%s3 + $0x34c] sm:$0xf]
    %v785 = vld [vmem:[%s3 + $0x350] sm:$0xf]
    %v786 = vld [vmem:[%s3 + $0x354] sm:$0xf]
    %v787 = vld [vmem:[%s3 + $0x358] sm:$0xf]
    %v788 = vld [vmem:[%s3 + $0x35c] sm:$0xf]
    %v789 = vld [vmem:[%s3 + $0x360] sm:$0xf]
    %v790 = vld [vmem:[%s3 + $0x364] sm:$0xf]
    %v791 = vld [vmem:[%s3 + $0x368] sm:$0xf]
    %v792 = vld [vmem:[%s3 + $0x36c] sm:$0xf]
    %v793 = vld [vmem:[%s3 + $0x370] sm:$0xf]
    %v794 = vld [vmem:[%s3 + $0x374] sm:$0xf]
    %v795 = vld [vmem:[%s3 + $0x378] sm:$0xf]
    %v796 = vld [vmem:[%s3 + $0x37c] sm:$0xf]
    %v797 = vld [vmem:[%s3 + $0x380] sm:$0xf]
    %v798 = vld [vmem:[%s3 + $0x384] sm:$0xf]
    %v799 = vld [vmem:[%s3 + $0x388] sm:$0xf]
    %v800 = vld [vmem:[%s3 + $0x38c] sm:$0xf]
    %v801 = vld [vmem:[%s3 + $0x390] sm:$0xf]
    %v802 = vld [vmem:[%s3 + $0x394] sm:$0xf]
    %v803 = vld [vmem:[%s3 + $0x398] sm:$0xf]
    %v804 = vld [vmem:[%s3 + $0x39c] sm:$0xf]
    %v805 = vld [vmem:[%s3 + $0x3a0] sm:$0xf]
    %v806 = vld [vmem:[%s3 + $0x3a4] sm:$0xf]
    %v807 = vld [vmem:[%s3 + $0x3a8] sm:$0xf]
    %v808 = vld [vmem:[%s3 + $0x3ac] sm:$0xf]
    %v809 = vld [vmem:[%s3 + $0x3b0] sm:$0xf]
    %v810 = vld [vmem:[%s3 + $0x3b4] sm:$0xf]
    %v811 = vld [vmem:[%s3 + $0x3b8] sm:$0xf]
    %v812 = vld [vmem:[%s3 + $0x3bc] sm:$0xf]
    %v813 = vld [vmem:[%s5] sm:$0x1]
    %v815 = vlaneseq
    %v816 = vshrl.u32 %v815, 7
    %v817 = vsub.s32 0, %v816
    %v818 = vrot.slane %v813, %v817
    %v828 = vunpack.c.l.b16 %v565
    %v829 = vunpack.c.h.b16 %v565
    %v830 = vunpack.c.l.b16 %v566
    %v831 = vunpack.c.h.b16 %v566
    %v832 = vunpack.c.l.b16 %v567
    %v833 = vunpack.c.h.b16 %v567
    %v834 = vunpack.c.l.b16 %v568
    %v835 = vunpack.c.h.b16 %v568
    %v836 = vunpack.c.l.b16 %v569
    %v837 = vunpack.c.h.b16 %v569
    %v838 = vunpack.c.l.b16 %v570
    %v839 = vunpack.c.h.b16 %v570
    %v840 = vunpack.c.l.b16 %v571
    %v841 = vunpack.c.h.b16 %v571
    %v842 = vunpack.c.l.b16 %v572
    %v843 = vpack.c.b16 %v828, %v828
    %v844 = vpack.c.b16 %v829, %v829
    %v845 = vpack.c.b16 %v830, %v830
    %v846 = vpack.c.b16 %v831, %v831
    %v847 = vpack.c.b16 %v832, %v832
    %v848 = vpack.c.b16 %v833, %v833
    %v849 = vpack.c.b16 %v834, %v834
    %v850 = vpack.c.b16 %v835, %v835
    %v851 = vpack.c.b16 %v836, %v836
    %v852 = vpack.c.b16 %v837, %v837
    %v853 = vpack.c.b16 %v838, %v838
    %v854 = vpack.c.b16 %v839, %v839
    %v855 = vpack.c.b16 %v840, %v840
    %v856 = vpack.c.b16 %v841, %v841
    %v857 = vpack.c.b16 %v842, %v842
    %v1113 = vunpack.c.l.b16 %v573
    %v1114 = vunpack.c.l.b16 %v574
    %v1115 = vunpack.c.l.b16 %v575
    %v1116 = vunpack.c.l.b16 %v576
    %v1117 = vunpack.c.l.b16 %v577
    %v1118 = vunpack.c.l.b16 %v578
    %v1119 = vunpack.c.l.b16 %v579
    %v1120 = vunpack.c.l.b16 %v580
    %v1121 = vunpack.c.l.b16 %v581
    %v1122 = vunpack.c.l.b16 %v582
    %v1123 = vunpack.c.l.b16 %v583
    %v1124 = vunpack.c.l.b16 %v584
    %v1125 = vunpack.c.l.b16 %v585
    %v1126 = vunpack.c.l.b16 %v586
    %v1127 = vunpack.c.l.b16 %v587
    %v1128 = vunpack.c.l.b16 %v588
    %v1129 = vunpack.c.l.b16 %v589
    %v1130 = vunpack.c.l.b16 %v590
    %v1131 = vunpack.c.l.b16 %v591
    %v1132 = vunpack.c.l.b16 %v592
    %v1133 = vunpack.c.l.b16 %v593
    %v1134 = vunpack.c.l.b16 %v594
    %v1135 = vunpack.c.l.b16 %v595
    %v1136 = vunpack.c.l.b16 %v596
    %v1137 = vunpack.c.l.b16 %v597
    %v1138 = vunpack.c.l.b16 %v598
    %v1139 = vunpack.c.l.b16 %v599
    %v1140 = vunpack.c.l.b16 %v600
    %v1141 = vunpack.c.l.b16 %v601
    %v1142 = vunpack.c.l.b16 %v602
    %v1143 = vunpack.c.l.b16 %v603
    %v1144 = vunpack.c.l.b16 %v604
    %v1145 = vunpack.c.l.b16 %v605
    %v1146 = vunpack.c.l.b16 %v606
    %v1147 = vunpack.c.l.b16 %v607
    %v1148 = vunpack.c.l.b16 %v608
    %v1149 = vunpack.c.l.b16 %v609
    %v1150 = vunpack.c.l.b16 %v610
    %v1151 = vunpack.c.l.b16 %v611
    %v1152 = vunpack.c.l.b16 %v612
    %v1153 = vunpack.c.l.b16 %v613
    %v1154 = vunpack.c.l.b16 %v614
    %v1155 = vunpack.c.l.b16 %v615
    %v1156 = vunpack.c.l.b16 %v616
    %v1157 = vunpack.c.l.b16 %v617
    %v1158 = vunpack.c.l.b16 %v618
    %v1159 = vunpack.c.l.b16 %v619
    %v1160 = vunpack.c.l.b16 %v620
    %v1161 = vunpack.c.l.b16 %v621
    %v1162 = vunpack.c.l.b16 %v622
    %v1163 = vunpack.c.l.b16 %v623
    %v1164 = vunpack.c.l.b16 %v624
    %v1165 = vunpack.c.l.b16 %v625
    %v1166 = vunpack.c.l.b16 %v626
    %v1167 = vunpack.c.l.b16 %v627
    %v1168 = vunpack.c.l.b16 %v628
    %v1169 = vunpack.c.l.b16 %v629
    %v1170 = vunpack.c.l.b16 %v630
    %v1171 = vunpack.c.l.b16 %v631
    %v1172 = vunpack.c.l.b16 %v632
    %v1173 = vunpack.c.l.b16 %v633
    %v1174 = vunpack.c.l.b16 %v634
    %v1175 = vunpack.c.l.b16 %v635
    %v1176 = vunpack.c.l.b16 %v636
    %v1177 = vunpack.c.l.b16 %v637
    %v1178 = vunpack.c.l.b16 %v638
    %v1179 = vunpack.c.l.b16 %v639
    %v1180 = vunpack.c.l.b16 %v640
    %v1181 = vunpack.c.l.b16 %v641
    %v1182 = vunpack.c.l.b16 %v642
    %v1183 = vunpack.c.l.b16 %v643
    %v1184 = vunpack.c.l.b16 %v644
    %v1185 = vunpack.c.l.b16 %v645
    %v1186 = vunpack.c.l.b16 %v646
    %v1187 = vunpack.c.l.b16 %v647
    %v1188 = vunpack.c.l.b16 %v648
    %v1189 = vunpack.c.l.b16 %v649
    %v1190 = vunpack.c.l.b16 %v650
    %v1191 = vunpack.c.l.b16 %v651
    %v1192 = vunpack.c.l.b16 %v652
    %v1193 = vunpack.c.l.b16 %v653
    %v1194 = vunpack.c.l.b16 %v654
    %v1195 = vunpack.c.l.b16 %v655
    %v1196 = vunpack.c.l.b16 %v656
    %v1197 = vunpack.c.l.b16 %v657
    %v1198 = vunpack.c.l.b16 %v658
    %v1199 = vunpack.c.l.b16 %v659
    %v1200 = vunpack.c.l.b16 %v660
    %v1201 = vunpack.c.l.b16 %v661
    %v1202 = vunpack.c.l.b16 %v662
    %v1203 = vunpack.c.l.b16 %v663
    %v1204 = vunpack.c.l.b16 %v664
    %v1205 = vunpack.c.l.b16 %v665
    %v1206 = vunpack.c.l.b16 %v666
    %v1207 = vunpack.c.l.b16 %v667
    %v1208 = vunpack.c.l.b16 %v668
    %v1209 = vunpack.c.l.b16 %v669
    %v1210 = vunpack.c.l.b16 %v670
    %v1211 = vunpack.c.l.b16 %v671
    %v1212 = vunpack.c.l.b16 %v672
    %v1213 = vunpack.c.l.b16 %v673
    %v1214 = vunpack.c.l.b16 %v674
    %v1215 = vunpack.c.l.b16 %v675
    %v1216 = vunpack.c.l.b16 %v676
    %v1217 = vunpack.c.l.b16 %v677
    %v1218 = vunpack.c.l.b16 %v678
    %v1219 = vunpack.c.l.b16 %v679
    %v1220 = vunpack.c.l.b16 %v680
    %v1221 = vunpack.c.l.b16 %v681
    %v1222 = vunpack.c.l.b16 %v682
    %v1223 = vunpack.c.l.b16 %v683
    %v1224 = vunpack.c.l.b16 %v684
    %v1225 = vunpack.c.l.b16 %v685
    %v1226 = vunpack.c.l.b16 %v686
    %v1227 = vunpack.c.l.b16 %v687
    %v1228 = vunpack.c.l.b16 %v688
    %v1229 = vunpack.c.l.b16 %v689
    %v1230 = vunpack.c.l.b16 %v690
    %v1231 = vunpack.c.l.b16 %v691
    %v1232 = vunpack.c.l.b16 %v692
    %v1233 = vunpack.c.l.b16 %v693
    %v1234 = vunpack.c.l.b16 %v694
    %v1235 = vunpack.c.l.b16 %v695
    %v1236 = vunpack.c.l.b16 %v696
    %v1237 = vunpack.c.l.b16 %v697
    %v1238 = vunpack.c.l.b16 %v698
    %v1239 = vunpack.c.l.b16 %v699
    %v1240 = vunpack.c.l.b16 %v700
    %v1241 = vunpack.c.l.b16 %v701
    %v1242 = vunpack.c.l.b16 %v702
    %v1243 = vunpack.c.l.b16 %v703
    %v1244 = vunpack.c.l.b16 %v704
    %v1245 = vunpack.c.l.b16 %v705
    %v1246 = vunpack.c.l.b16 %v706
    %v1247 = vunpack.c.l.b16 %v707
    %v1248 = vunpack.c.l.b16 %v708
    %v1249 = vunpack.c.l.b16 %v709
    %v1250 = vunpack.c.l.b16 %v710
    %v1251 = vunpack.c.l.b16 %v711
    %v1252 = vunpack.c.l.b16 %v712
    %v1253 = vunpack.c.l.b16 %v713
    %v1254 = vunpack.c.l.b16 %v714
    %v1255 = vunpack.c.l.b16 %v715
    %v1256 = vunpack.c.l.b16 %v716
    %v1257 = vunpack.c.l.b16 %v717
    %v1258 = vunpack.c.l.b16 %v718
    %v1259 = vunpack.c.l.b16 %v719
    %v1260 = vunpack.c.l.b16 %v720
    %v1261 = vunpack.c.l.b16 %v721
    %v1262 = vunpack.c.l.b16 %v722
    %v1263 = vunpack.c.l.b16 %v723
    %v1264 = vunpack.c.l.b16 %v724
    %v1265 = vunpack.c.l.b16 %v725
    %v1266 = vunpack.c.l.b16 %v726
    %v1267 = vunpack.c.l.b16 %v727
    %v1268 = vunpack.c.l.b16 %v728
    %v1269 = vunpack.c.l.b16 %v729
    %v1270 = vunpack.c.l.b16 %v730
    %v1271 = vunpack.c.l.b16 %v731
    %v1272 = vunpack.c.l.b16 %v732
    %v1273 = vunpack.c.l.b16 %v733
    %v1274 = vunpack.c.l.b16 %v734
    %v1275 = vunpack.c.l.b16 %v735
    %v1276 = vunpack.c.l.b16 %v736
    %v1277 = vunpack.c.l.b16 %v737
    %v1278 = vunpack.c.l.b16 %v738
    %v1279 = vunpack.c.l.b16 %v739
    %v1280 = vunpack.c.l.b16 %v740
    %v1281 = vunpack.c.l.b16 %v741
    %v1282 = vunpack.c.l.b16 %v742
    %v1283 = vunpack.c.l.b16 %v743
    %v1284 = vunpack.c.l.b16 %v744
    %v1285 = vunpack.c.l.b16 %v745
    %v1286 = vunpack.c.l.b16 %v746
    %v1287 = vunpack.c.l.b16 %v747
    %v1288 = vunpack.c.l.b16 %v748
    %v1289 = vunpack.c.l.b16 %v749
    %v1290 = vunpack.c.l.b16 %v750
    %v1291 = vunpack.c.l.b16 %v751
    %v1292 = vunpack.c.l.b16 %v752
    %v1293 = vunpack.c.l.b16 %v753
    %v1294 = vunpack.c.l.b16 %v754
    %v1295 = vunpack.c.l.b16 %v755
    %v1296 = vunpack.c.l.b16 %v756
    %v1297 = vunpack.c.l.b16 %v757
    %v1298 = vunpack.c.l.b16 %v758
    %v1299 = vunpack.c.l.b16 %v759
    %v1300 = vunpack.c.l.b16 %v760
    %v1301 = vunpack.c.l.b16 %v761
    %v1302 = vunpack.c.l.b16 %v762
    %v1303 = vunpack.c.l.b16 %v763
    %v1304 = vunpack.c.l.b16 %v764
    %v1305 = vunpack.c.l.b16 %v765
    %v1306 = vunpack.c.l.b16 %v766
    %v1307 = vunpack.c.l.b16 %v767
    %v1308 = vunpack.c.l.b16 %v768
    %v1309 = vunpack.c.l.b16 %v769
    %v1310 = vunpack.c.l.b16 %v770
    %v1311 = vunpack.c.l.b16 %v771
    %v1312 = vunpack.c.l.b16 %v772
    %v1313 = vunpack.c.l.b16 %v773
    %v1314 = vunpack.c.l.b16 %v774
    %v1315 = vunpack.c.l.b16 %v775
    %v1316 = vunpack.c.l.b16 %v776
    %v1317 = vunpack.c.l.b16 %v777
    %v1318 = vunpack.c.l.b16 %v778
    %v1319 = vunpack.c.l.b16 %v779
    %v1320 = vunpack.c.l.b16 %v780
    %v1321 = vunpack.c.l.b16 %v781
    %v1322 = vunpack.c.l.b16 %v782
    %v1323 = vunpack.c.l.b16 %v783
    %v1324 = vunpack.c.l.b16 %v784
    %v1325 = vunpack.c.l.b16 %v785
    %v1326 = vunpack.c.l.b16 %v786
    %v1327 = vunpack.c.l.b16 %v787
    %v1328 = vunpack.c.l.b16 %v788
    %v1329 = vunpack.c.l.b16 %v789
    %v1330 = vunpack.c.l.b16 %v790
    %v1331 = vunpack.c.l.b16 %v791
    %v1332 = vunpack.c.l.b16 %v792
    %v1333 = vunpack.c.l.b16 %v793
    %v1334 = vunpack.c.l.b16 %v794
    %v1335 = vunpack.c.l.b16 %v795
    %v1336 = vunpack.c.l.b16 %v796
    %v1337 = vunpack.c.l.b16 %v797
    %v1338 = vunpack.c.l.b16 %v798
    %v1339 = vunpack.c.l.b16 %v799
    %v1340 = vunpack.c.l.b16 %v800
    %v1341 = vunpack.c.l.b16 %v801
    %v1342 = vunpack.c.l.b16 %v802
    %v1343 = vunpack.c.l.b16 %v803
    %v1344 = vunpack.c.l.b16 %v804
    %v1345 = vunpack.c.l.b16 %v805
    %v1346 = vunpack.c.l.b16 %v806
    %v1347 = vunpack.c.l.b16 %v807
    %v1348 = vunpack.c.l.b16 %v808
    %v1349 = vunpack.c.l.b16 %v809
    %v1350 = vunpack.c.l.b16 %v810
    %v1351 = vunpack.c.l.b16 %v811
    %v1352 = vunpack.c.l.b16 %v812
    %v1353 = vpack.c.b16 %v1114, %v1113
    %v1354 = vpack.c.b16 %v1116, %v1115
    %v1355 = vpack.c.b16 %v1118, %v1117
    %v1356 = vpack.c.b16 %v1120, %v1119
    %v1357 = vpack.c.b16 %v1122, %v1121
    %v1358 = vpack.c.b16 %v1124, %v1123
    %v1359 = vpack.c.b16 %v1126, %v1125
    %v1360 = vpack.c.b16 %v1128, %v1127
    %v1361 = vpack.c.b16 %v1130, %v1129
    %v1362 = vpack.c.b16 %v1132, %v1131
    %v1363 = vpack.c.b16 %v1134, %v1133
    %v1364 = vpack.c.b16 %v1136, %v1135
    %v1365 = vpack.c.b16 %v1138, %v1137
    %v1366 = vpack.c.b16 %v1140, %v1139
    %v1367 = vpack.c.b16 %v1142, %v1141
    %v1368 = vpack.c.b16 %v1144, %v1143
    %v1369 = vpack.c.b16 %v1146, %v1145
    %v1370 = vpack.c.b16 %v1148, %v1147
    %v1371 = vpack.c.b16 %v1150, %v1149
    %v1372 = vpack.c.b16 %v1152, %v1151
    %v1373 = vpack.c.b16 %v1154, %v1153
    %v1374 = vpack.c.b16 %v1156, %v1155
    %v1375 = vpack.c.b16 %v1158, %v1157
    %v1376 = vpack.c.b16 %v1160, %v1159
    %v1377 = vpack.c.b16 %v1162, %v1161
    %v1378 = vpack.c.b16 %v1164, %v1163
    %v1379 = vpack.c.b16 %v1166, %v1165
    %v1380 = vpack.c.b16 %v1168, %v1167
    %v1381 = vpack.c.b16 %v1170, %v1169
    %v1382 = vpack.c.b16 %v1172, %v1171
    %v1383 = vpack.c.b16 %v1174, %v1173
    %v1384 = vpack.c.b16 %v1176, %v1175
    %v1385 = vpack.c.b16 %v1178, %v1177
    %v1386 = vpack.c.b16 %v1180, %v1179
    %v1387 = vpack.c.b16 %v1182, %v1181
    %v1388 = vpack.c.b16 %v1184, %v1183
    %v1389 = vpack.c.b16 %v1186, %v1185
    %v1390 = vpack.c.b16 %v1188, %v1187
    %v1391 = vpack.c.b16 %v1190, %v1189
    %v1392 = vpack.c.b16 %v1192, %v1191
    %v1393 = vpack.c.b16 %v1194, %v1193
    %v1394 = vpack.c.b16 %v1196, %v1195
    %v1395 = vpack.c.b16 %v1198, %v1197
    %v1396 = vpack.c.b16 %v1200, %v1199
    %v1397 = vpack.c.b16 %v1202, %v1201
    %v1398 = vpack.c.b16 %v1204, %v1203
    %v1399 = vpack.c.b16 %v1206, %v1205
    %v1400 = vpack.c.b16 %v1208, %v1207
    %v1401 = vpack.c.b16 %v1210, %v1209
    %v1402 = vpack.c.b16 %v1212, %v1211
    %v1403 = vpack.c.b16 %v1214, %v1213
    %v1404 = vpack.c.b16 %v1216, %v1215
    %v1405 = vpack.c.b16 %v1218, %v1217
    %v1406 = vpack.c.b16 %v1220, %v1219
    %v1407 = vpack.c.b16 %v1222, %v1221
    %v1408 = vpack.c.b16 %v1224, %v1223
    %v1409 = vpack.c.b16 %v1226, %v1225
    %v1410 = vpack.c.b16 %v1228, %v1227
    %v1411 = vpack.c.b16 %v1230, %v1229
    %v1412 = vpack.c.b16 %v1232, %v1231
    %v1413 = vpack.c.b16 %v1234, %v1233
    %v1414 = vpack.c.b16 %v1236, %v1235
    %v1415 = vpack.c.b16 %v1238, %v1237
    %v1416 = vpack.c.b16 %v1240, %v1239
    %v1417 = vpack.c.b16 %v1242, %v1241
    %v1418 = vpack.c.b16 %v1244, %v1243
    %v1419 = vpack.c.b16 %v1246, %v1245
    %v1420 = vpack.c.b16 %v1248, %v1247
    %v1421 = vpack.c.b16 %v1250, %v1249
    %v1422 = vpack.c.b16 %v1252, %v1251
    %v1423 = vpack.c.b16 %v1254, %v1253
    %v1424 = vpack.c.b16 %v1256, %v1255
    %v1425 = vpack.c.b16 %v1258, %v1257
    %v1426 = vpack.c.b16 %v1260, %v1259
    %v1427 = vpack.c.b16 %v1262, %v1261
    %v1428 = vpack.c.b16 %v1264, %v1263
    %v1429 = vpack.c.b16 %v1266, %v1265
    %v1430 = vpack.c.b16 %v1268, %v1267
    %v1431 = vpack.c.b16 %v1270, %v1269
    %v1432 = vpack.c.b16 %v1272, %v1271
    %v1433 = vpack.c.b16 %v1274, %v1273
    %v1434 = vpack.c.b16 %v1276, %v1275
    %v1435 = vpack.c.b16 %v1278, %v1277
    %v1436 = vpack.c.b16 %v1280, %v1279
    %v1437 = vpack.c.b16 %v1282, %v1281
    %v1438 = vpack.c.b16 %v1284, %v1283
    %v1439 = vpack.c.b16 %v1286, %v1285
    %v1440 = vpack.c.b16 %v1288, %v1287
    %v1441 = vpack.c.b16 %v1290, %v1289
    %v1442 = vpack.c.b16 %v1292, %v1291
    %v1443 = vpack.c.b16 %v1294, %v1293
    %v1444 = vpack.c.b16 %v1296, %v1295
    %v1445 = vpack.c.b16 %v1298, %v1297
    %v1446 = vpack.c.b16 %v1300, %v1299
    %v1447 = vpack.c.b16 %v1302, %v1301
    %v1448 = vpack.c.b16 %v1304, %v1303
    %v1449 = vpack.c.b16 %v1306, %v1305
    %v1450 = vpack.c.b16 %v1308, %v1307
    %v1451 = vpack.c.b16 %v1310, %v1309
    %v1452 = vpack.c.b16 %v1312, %v1311
    %v1453 = vpack.c.b16 %v1314, %v1313
    %v1454 = vpack.c.b16 %v1316, %v1315
    %v1455 = vpack.c.b16 %v1318, %v1317
    %v1456 = vpack.c.b16 %v1320, %v1319
    %v1457 = vpack.c.b16 %v1322, %v1321
    %v1458 = vpack.c.b16 %v1324, %v1323
    %v1459 = vpack.c.b16 %v1326, %v1325
    %v1460 = vpack.c.b16 %v1328, %v1327
    %v1461 = vpack.c.b16 %v1330, %v1329
    %v1462 = vpack.c.b16 %v1332, %v1331
    %v1463 = vpack.c.b16 %v1334, %v1333
    %v1464 = vpack.c.b16 %v1336, %v1335
    %v1465 = vpack.c.b16 %v1338, %v1337
    %v1466 = vpack.c.b16 %v1340, %v1339
    %v1467 = vpack.c.b16 %v1342, %v1341
    %v1468 = vpack.c.b16 %v1344, %v1343
    %v1469 = vpack.c.b16 %v1346, %v1345
    %v1470 = vpack.c.b16 %v1348, %v1347
    %v1471 = vpack.c.b16 %v1350, %v1349
    %v1472 = vpack.c.b16 %v1352, %v1351
    %1593 = vmatprep.subr.bf16.mxu0 0
    %1594 = vmatpush1.bf16.msra.mxu0 %v1353
    %1595 = vmatprep.subr.bf16.mxu0 0
    %1596 = vmatpush1.bf16.msra.mxu0 %v1354
    %1597 = vmatprep.subr.bf16.mxu0 0
    %1598 = vmatpush1.bf16.msra.mxu0 %v1355
    %1599 = vmatprep.subr.bf16.mxu0 0
    %1600 = vmatpush1.bf16.msra.mxu0 %v1356
    %1601 = vmatprep.subr.bf16.mxu0 0
    %1602 = vmatpush1.bf16.msra.mxu0 %v1357
    %1603 = vmatprep.subr.bf16.mxu0 0
    %1604 = vmatpush1.bf16.msra.mxu0 %v1358
    %1605 = vmatprep.subr.bf16.mxu0 0
    %1606 = vmatpush1.bf16.msra.mxu0 %v1359
    %1607 = vmatprep.subr.bf16.mxu0 0
    %1608 = vmatpush1.bf16.msra.mxu0 %v1360
    %1609 = vmatprep.subr.bf16.mxu0 0
    %1610 = vmatpush1.bf16.msra.mxu0 %v1361
    %1611 = vmatprep.subr.bf16.mxu0 0
    %1612 = vmatpush1.bf16.msra.mxu0 %v1362
    %1613 = vmatprep.subr.bf16.mxu0 0
    %1614 = vmatpush1.bf16.msra.mxu0 %v1363
    %1615 = vmatprep.subr.bf16.mxu0 0
    %1616 = vmatpush1.bf16.msra.mxu0 %v1364
    %1617 = vmatprep.subr.bf16.mxu0 0
    %1618 = vmatpush1.bf16.msra.mxu0 %v1365
    %1619 = vmatprep.subr.bf16.mxu0 0
    %1620 = vmatpush1.bf16.msra.mxu0 %v1366
    %1621 = vmatprep.subr.bf16.mxu0 0
    %1622 = vmatpush1.bf16.msra.mxu0 %v1367
    %1623 = vmatprep.subr.bf16.mxu0 0
    %1624 = vmatpush1.bf16.msra.mxu0 %v1368
    %1625 = vmatprep.mubr.bf16.mxu0 %v844
    %1626 = vmatmul.mubr.bf16.gmra.mrb[0].mxu0 %v843
    %v1627 = vpop.f32.mrb[0].mxu0
    %v1628 = vadd.f32 %v818, %v1627
    %v1629 = vpop.f32.mrb[0].mxu0
    %v1630 = vpop.f32.mrb[0].mxu0
    %v1631 = vpop.f32.mrb[0].mxu0
    %1632 = vdwg.mxu0
    %1633 = vmatprep.subr.bf16.mxu0 0
    %1634 = vmatpush1.bf16.msra.mxu0 %v1369
    %1635 = vmatprep.subr.bf16.mxu0 0
    %1636 = vmatpush1.bf16.msra.mxu0 %v1370
    %1637 = vmatprep.subr.bf16.mxu0 0
    %1638 = vmatpush1.bf16.msra.mxu0 %v1371
    %1639 = vmatprep.subr.bf16.mxu0 0
    %1640 = vmatpush1.bf16.msra.mxu0 %v1372
    %1641 = vmatprep.subr.bf16.mxu0 0
    %1642 = vmatpush1.bf16.msra.mxu0 %v1373
    %1643 = vmatprep.subr.bf16.mxu0 0
    %1644 = vmatpush1.bf16.msra.mxu0 %v1374
    %1645 = vmatprep.subr.bf16.mxu0 0
    %1646 = vmatpush1.bf16.msra.mxu0 %v1375
    %1647 = vmatprep.subr.bf16.mxu0 0
    %1648 = vmatpush1.bf16.msra.mxu0 %v1376
    %1649 = vmatprep.subr.bf16.mxu0 0
    %1650 = vmatpush1.bf16.msra.mxu0 %v1377
    %1651 = vmatprep.subr.bf16.mxu0 0
    %1652 = vmatpush1.bf16.msra.mxu0 %v1378
    %1653 = vmatprep.subr.bf16.mxu0 0
    %1654 = vmatpush1.bf16.msra.mxu0 %v1379
    %1655 = vmatprep.subr.bf16.mxu0 0
    %1656 = vmatpush1.bf16.msra.mxu0 %v1380
    %1657 = vmatprep.subr.bf16.mxu0 0
    %1658 = vmatpush1.bf16.msra.mxu0 %v1381
    %1659 = vmatprep.subr.bf16.mxu0 0
    %1660 = vmatpush1.bf16.msra.mxu0 %v1382
    %1661 = vmatprep.subr.bf16.mxu0 0
    %1662 = vmatpush1.bf16.msra.mxu0 %v1383
    %1663 = vmatprep.subr.bf16.mxu0 0
    %1664 = vmatpush1.bf16.msra.mxu0 %v1384
    %1665 = vmatprep.mubr.bf16.mxu0 %v846
    %1666 = vmatmul.mubr.bf16.gmra.mrb[0].mxu0 %v845
    %v1667 = vpop.f32.mrb[0].mxu0
    %v1668 = vadd.f32 %v1628, %v1667
    %v1669 = vpop.f32.mrb[0].mxu0
    %v1670 = vpop.f32.mrb[0].mxu0
    %v1671 = vpop.f32.mrb[0].mxu0
    %1672 = vdwg.mxu0
    %1673 = vmatprep.subr.bf16.mxu0 0
    %1674 = vmatpush1.bf16.msra.mxu0 %v1385
    %1675 = vmatprep.subr.bf16.mxu0 0
    %1676 = vmatpush1.bf16.msra.mxu0 %v1386
    %1677 = vmatprep.subr.bf16.mxu0 0
    %1678 = vmatpush1.bf16.msra.mxu0 %v1387
    %1679 = vmatprep.subr.bf16.mxu0 0
    %1680 = vmatpush1.bf16.msra.mxu0 %v1388
    %1681 = vmatprep.subr.bf16.mxu0 0
    %1682 = vmatpush1.bf16.msra.mxu0 %v1389
    %1683 = vmatprep.subr.bf16.mxu0 0
    %1684 = vmatpush1.bf16.msra.mxu0 %v1390
    %1685 = vmatprep.subr.bf16.mxu0 0
    %1686 = vmatpush1.bf16.msra.mxu0 %v1391
    %1687 = vmatprep.subr.bf16.mxu0 0
    %1688 = vmatpush1.bf16.msra.mxu0 %v1392
    %1689 = vmatprep.subr.bf16.mxu0 0
    %1690 = vmatpush1.bf16.msra.mxu0 %v1393
    %1691 = vmatprep.subr.bf16.mxu0 0
    %1692 = vmatpush1.bf16.msra.mxu0 %v1394
    %1693 = vmatprep.subr.bf16.mxu0 0
    %1694 = vmatpush1.bf16.msra.mxu0 %v1395
    %1695 = vmatprep.subr.bf16.mxu0 0
    %1696 = vmatpush1.bf16.msra.mxu0 %v1396
    %1697 = vmatprep.subr.bf16.mxu0 0
    %1698 = vmatpush1.bf16.msra.mxu0 %v1397
    %1699 = vmatprep.subr.bf16.mxu0 0
    %1700 = vmatpush1.bf16.msra.mxu0 %v1398
    %1701 = vmatprep.subr.bf16.mxu0 0
    %1702 = vmatpush1.bf16.msra.mxu0 %v1399
    %1703 = vmatprep.subr.bf16.mxu0 0
    %1704 = vmatpush1.bf16.msra.mxu0 %v1400
    %1705 = vmatprep.mubr.bf16.mxu0 %v848
    %1706 = vmatmul.mubr.bf16.gmra.mrb[0].mxu0 %v847
    %v1707 = vpop.f32.mrb[0].mxu0
    %v1708 = vadd.f32 %v1668, %v1707
    %v1709 = vpop.f32.mrb[0].mxu0
    %v1710 = vpop.f32.mrb[0].mxu0
    %v1711 = vpop.f32.mrb[0].mxu0
    %1712 = vdwg.mxu0
    %1713 = vmatprep.subr.bf16.mxu0 0
    %1714 = vmatpush1.bf16.msra.mxu0 %v1401
    %1715 = vmatprep.subr.bf16.mxu0 0
    %1716 = vmatpush1.bf16.msra.mxu0 %v1402
    %1717 = vmatprep.subr.bf16.mxu0 0
    %1718 = vmatpush1.bf16.msra.mxu0 %v1403
    %1719 = vmatprep.subr.bf16.mxu0 0
    %1720 = vmatpush1.bf16.msra.mxu0 %v1404
    %1721 = vmatprep.subr.bf16.mxu0 0
    %1722 = vmatpush1.bf16.msra.mxu0 %v1405
    %1723 = vmatprep.subr.bf16.mxu0 0
    %1724 = vmatpush1.bf16.msra.mxu0 %v1406
    %1725 = vmatprep.subr.bf16.mxu0 0
    %1726 = vmatpush1.bf16.msra.mxu0 %v1407
    %1727 = vmatprep.subr.bf16.mxu0 0
    %1728 = vmatpush1.bf16.msra.mxu0 %v1408
    %1729 = vmatprep.subr.bf16.mxu0 0
    %1730 = vmatpush1.bf16.msra.mxu0 %v1409
    %1731 = vmatprep.subr.bf16.mxu0 0
    %1732 = vmatpush1.bf16.msra.mxu0 %v1410
    %1733 = vmatprep.subr.bf16.mxu0 0
    %1734 = vmatpush1.bf16.msra.mxu0 %v1411
    %1735 = vmatprep.subr.bf16.mxu0 0
    %1736 = vmatpush1.bf16.msra.mxu0 %v1412
    %1737 = vmatprep.subr.bf16.mxu0 0
    %1738 = vmatpush1.bf16.msra.mxu0 %v1413
    %1739 = vmatprep.subr.bf16.mxu0 0
    %1740 = vmatpush1.bf16.msra.mxu0 %v1414
    %1741 = vmatprep.subr.bf16.mxu0 0
    %1742 = vmatpush1.bf16.msra.mxu0 %v1415
    %1743 = vmatprep.subr.bf16.mxu0 0
    %1744 = vmatpush1.bf16.msra.mxu0 %v1416
    %1745 = vmatprep.mubr.bf16.mxu0 %v850
    %1746 = vmatmul.mubr.bf16.gmra.mrb[0].mxu0 %v849
    %v1747 = vpop.f32.mrb[0].mxu0
    %v1748 = vadd.f32 %v1708, %v1747
    %v1749 = vpop.f32.mrb[0].mxu0
    %v1750 = vpop.f32.mrb[0].mxu0
    %v1751 = vpop.f32.mrb[0].mxu0
    %1752 = vdwg.mxu0
    %1753 = vmatprep.subr.bf16.mxu0 0
    %1754 = vmatpush1.bf16.msra.mxu0 %v1417
    %1755 = vmatprep.subr.bf16.mxu0 0
    %1756 = vmatpush1.bf16.msra.mxu0 %v1418
    %1757 = vmatprep.subr.bf16.mxu0 0
    %1758 = vmatpush1.bf16.msra.mxu0 %v1419
    %1759 = vmatprep.subr.bf16.mxu0 0
    %1760 = vmatpush1.bf16.msra.mxu0 %v1420
    %1761 = vmatprep.subr.bf16.mxu0 0
    %1762 = vmatpush1.bf16.msra.mxu0 %v1421
    %1763 = vmatprep.subr.bf16.mxu0 0
    %1764 = vmatpush1.bf16.msra.mxu0 %v1422
    %1765 = vmatprep.subr.bf16.mxu0 0
    %1766 = vmatpush1.bf16.msra.mxu0 %v1423
    %1767 = vmatprep.subr.bf16.mxu0 0
    %1768 = vmatpush1.bf16.msra.mxu0 %v1424
    %1769 = vmatprep.subr.bf16.mxu0 0
    %1770 = vmatpush1.bf16.msra.mxu0 %v1425
    %1771 = vmatprep.subr.bf16.mxu0 0
    %1772 = vmatpush1.bf16.msra.mxu0 %v1426
    %1773 = vmatprep.subr.bf16.mxu0 0
    %1774 = vmatpush1.bf16.msra.mxu0 %v1427
    %1775 = vmatprep.subr.bf16.mxu0 0
    %1776 = vmatpush1.bf16.msra.mxu0 %v1428
    %1777 = vmatprep.subr.bf16.mxu0 0
    %1778 = vmatpush1.bf16.msra.mxu0 %v1429
    %1779 = vmatprep.subr.bf16.mxu0 0
    %1780 = vmatpush1.bf16.msra.mxu0 %v1430
    %1781 = vmatprep.subr.bf16.mxu0 0
    %1782 = vmatpush1.bf16.msra.mxu0 %v1431
    %1783 = vmatprep.subr.bf16.mxu0 0
    %1784 = vmatpush1.bf16.msra.mxu0 %v1432
    %1785 = vmatprep.mubr.bf16.mxu0 %v852
    %1786 = vmatmul.mubr.bf16.gmra.mrb[0].mxu0 %v851
    %v1787 = vpop.f32.mrb[0].mxu0
    %v1788 = vadd.f32 %v1748, %v1787
    %v1789 = vpop.f32.mrb[0].mxu0
    %v1790 = vpop.f32.mrb[0].mxu0
    %v1791 = vpop.f32.mrb[0].mxu0
    %1792 = vdwg.mxu0
    %1793 = vmatprep.subr.bf16.mxu0 0
    %1794 = vmatpush1.bf16.msra.mxu0 %v1433
    %1795 = vmatprep.subr.bf16.mxu0 0
    %1796 = vmatpush1.bf16.msra.mxu0 %v1434
    %1797 = vmatprep.subr.bf16.mxu0 0
    %1798 = vmatpush1.bf16.msra.mxu0 %v1435
    %1799 = vmatprep.subr.bf16.mxu0 0
    %1800 = vmatpush1.bf16.msra.mxu0 %v1436
    %1801 = vmatprep.subr.bf16.mxu0 0
    %1802 = vmatpush1.bf16.msra.mxu0 %v1437
    %1803 = vmatprep.subr.bf16.mxu0 0
    %1804 = vmatpush1.bf16.msra.mxu0 %v1438
    %1805 = vmatprep.subr.bf16.mxu0 0
    %1806 = vmatpush1.bf16.msra.mxu0 %v1439
    %1807 = vmatprep.subr.bf16.mxu0 0
    %1808 = vmatpush1.bf16.msra.mxu0 %v1440
    %1809 = vmatprep.subr.bf16.mxu0 0
    %1810 = vmatpush1.bf16.msra.mxu0 %v1441
    %1811 = vmatprep.subr.bf16.mxu0 0
    %1812 = vmatpush1.bf16.msra.mxu0 %v1442
    %1813 = vmatprep.subr.bf16.mxu0 0
    %1814 = vmatpush1.bf16.msra.mxu0 %v1443
    %1815 = vmatprep.subr.bf16.mxu0 0
    %1816 = vmatpush1.bf16.msra.mxu0 %v1444
    %1817 = vmatprep.subr.bf16.mxu0 0
    %1818 = vmatpush1.bf16.msra.mxu0 %v1445
    %1819 = vmatprep.subr.bf16.mxu0 0
    %1820 = vmatpush1.bf16.msra.mxu0 %v1446
    %1821 = vmatprep.subr.bf16.mxu0 0
    %1822 = vmatpush1.bf16.msra.mxu0 %v1447
    %1823 = vmatprep.subr.bf16.mxu0 0
    %1824 = vmatpush1.bf16.msra.mxu0 %v1448
    %1825 = vmatprep.mubr.bf16.mxu0 %v854
    %1826 = vmatmul.mubr.bf16.gmra.mrb[0].mxu0 %v853
    %v1827 = vpop.f32.mrb[0].mxu0
    %v1828 = vadd.f32 %v1788, %v1827
    %v1829 = vpop.f32.mrb[0].mxu0
    %v1830 = vpop.f32.mrb[0].mxu0
    %v1831 = vpop.f32.mrb[0].mxu0
    %1832 = vdwg.mxu0
    %1833 = vmatprep.subr.bf16.mxu0 0
    %1834 = vmatpush1.bf16.msra.mxu0 %v1449
    %1835 = vmatprep.subr.bf16.mxu0 0
    %1836 = vmatpush1.bf16.msra.mxu0 %v1450
    %1837 = vmatprep.subr.bf16.mxu0 0
    %1838 = vmatpush1.bf16.msra.mxu0 %v1451
    %1839 = vmatprep.subr.bf16.mxu0 0
    %1840 = vmatpush1.bf16.msra.mxu0 %v1452
    %1841 = vmatprep.subr.bf16.mxu0 0
    %1842 = vmatpush1.bf16.msra.mxu0 %v1453
    %1843 = vmatprep.subr.bf16.mxu0 0
    %1844 = vmatpush1.bf16.msra.mxu0 %v1454
    %1845 = vmatprep.subr.bf16.mxu0 0
    %1846 = vmatpush1.bf16.msra.mxu0 %v1455
    %1847 = vmatprep.subr.bf16.mxu0 0
    %1848 = vmatpush1.bf16.msra.mxu0 %v1456
    %1849 = vmatprep.subr.bf16.mxu0 0
    %1850 = vmatpush1.bf16.msra.mxu0 %v1457
    %1851 = vmatprep.subr.bf16.mxu0 0
    %1852 = vmatpush1.bf16.msra.mxu0 %v1458
    %1853 = vmatprep.subr.bf16.mxu0 0
    %1854 = vmatpush1.bf16.msra.mxu0 %v1459
    %1855 = vmatprep.subr.bf16.mxu0 0
    %1856 = vmatpush1.bf16.msra.mxu0 %v1460
    %1857 = vmatprep.subr.bf16.mxu0 0
    %1858 = vmatpush1.bf16.msra.mxu0 %v1461
    %1859 = vmatprep.subr.bf16.mxu0 0
    %1860 = vmatpush1.bf16.msra.mxu0 %v1462
    %1861 = vmatprep.subr.bf16.mxu0 0
    %1862 = vmatpush1.bf16.msra.mxu0 %v1463
    %1863 = vmatprep.subr.bf16.mxu0 0
    %1864 = vmatpush1.bf16.msra.mxu0 %v1464
    %1865 = vmatprep.mubr.bf16.mxu0 %v856
    %1866 = vmatmul.mubr.bf16.gmra.mrb[0].mxu0 %v855
    %v1867 = vpop.f32.mrb[0].mxu0
    %v1868 = vadd.f32 %v1828, %v1867
    %v1869 = vpop.f32.mrb[0].mxu0
    %v1870 = vpop.f32.mrb[0].mxu0
    %v1871 = vpop.f32.mrb[0].mxu0
    %1872 = vdwg.mxu0
    %1873 = vmatprep.subr.bf16.mxu0 0
    %1874 = vmatpush1.bf16.msra.mxu0 %v1465
    %1875 = vmatprep.subr.bf16.mxu0 0
    %1876 = vmatpush1.bf16.msra.mxu0 %v1466
    %1877 = vmatprep.subr.bf16.mxu0 0
    %1878 = vmatpush1.bf16.msra.mxu0 %v1467
    %1879 = vmatprep.subr.bf16.mxu0 0
    %1880 = vmatpush1.bf16.msra.mxu0 %v1468
    %1881 = vmatprep.subr.bf16.mxu0 0
    %1882 = vmatpush1.bf16.msra.mxu0 %v1469
    %1883 = vmatprep.subr.bf16.mxu0 0
    %1884 = vmatpush1.bf16.msra.mxu0 %v1470
    %1885 = vmatprep.subr.bf16.mxu0 0
    %1886 = vmatpush1.bf16.msra.mxu0 %v1471
    %1887 = vmatprep.subr.bf16.mxu0 0
    %1888 = vmatpush1.bf16.msra.mxu0 %v1472
    %1889 = vmatprep.subr.bf16.mxu0 0
    %1890 = vmatpush1.bf16.msra.mxu0 0
    %1891 = vmatprep.subr.bf16.mxu0 0
    %1892 = vmatpush1.bf16.msra.mxu0 0
    %1893 = vmatprep.subr.bf16.mxu0 0
    %1894 = vmatpush1.bf16.msra.mxu0 0
    %1895 = vmatprep.subr.bf16.mxu0 0
    %1896 = vmatpush1.bf16.msra.mxu0 0
    %1897 = vmatprep.subr.bf16.mxu0 0
    %1898 = vmatpush1.bf16.msra.mxu0 0
    %1899 = vmatprep.subr.bf16.mxu0 0
    %1900 = vmatpush1.bf16.msra.mxu0 0
    %1901 = vmatprep.subr.bf16.mxu0 0
    %1902 = vmatpush1.bf16.msra.mxu0 0
    %1903 = vmatprep.subr.bf16.mxu0 0
    %1904 = vmatpush1.bf16.msra.mxu0 0
    %1905 = vmatprep.mubr.bf16.mxu0 0
    %1906 = vmatmul.mubr.bf16.gmra.mrb[0].mxu0 %v857
    %v1907 = vpop.f32.mrb[0].mxu0
    %v1908 = vadd.f32 %v1868, %v1907
    %v1909 = vpop.f32.mrb[0].mxu0
    %v1910 = vpop.f32.mrb[0].mxu0
    %v1911 = vpop.f32.mrb[0].mxu0
    %1912 = vdwg.mxu0
    %v1913 = vadd.f32 %v560, 1.0
    %v1914 = vadd.f32 %v1908, 1.0
    %vm1915 = vcmask 80896
    %v1916 = vsel %vm1915, %v1913, 0.0
    %1917 = vadd.xlane.f32.xlu0 %v1916
    %v1918 = vpop.xlane.xlu0 %1917
    %v1919 = vsel %vm1915, %v1914, 0.0
    %1920 = vadd.xlane.f32.xlu0 %v1919
    %v1921 = vpop.xlane.xlu0 %1920
    %v1922 = vrcp.pop %v1918
    %v1923 = vmul.f32 %v1918, %v1922
    %v1924 = vsub.f32 2.0, %v1923
    %v1925 = vmul.f32 %v1922, %v1924
    %v1926 = vrcp.pop %v1921
    %v1927 = vmul.f32 %v1921, %v1926
    %v1928 = vsub.f32 2.0, %v1927
    %v1929 = vmul.f32 %v1926, %v1928
    %v1930 = vmul.f32 %v560, %v1925
    %v1931 = vmul.f32 %v1908, %v1929
    %v1932 = vmul.f32 %v1925, 10.0
    %v1933 = vmul.f32 %v1929, 10.0
    %v1934 = vsel %vm1915, %v1930, 0.0
    %1935 = vadd.xlane.f32.xlu0 %v1934
    %v1936 = vpop.xlane.xlu0 %1935
    %v1937 = vsel %vm1915, %v1931, 0.0
    %1938 = vadd.xlane.f32.xlu0 %v1937
    %v1939 = vpop.xlane.xlu0 %1938
    %v1940 = vmul.f32 %v1936, %v1939
    %v1941 = vmul.f32 %v1930, %v1931
    %v1942 = vsel %vm1915, %v1941, 0.0
    %1943 = vadd.xlane.f32.xlu0 %v1942
    %v1944 = vpop.xlane.xlu0 %1943
    %v1945 = vsub.f32 %v1940, %v1944
    %v1946 = vsub.f32 1.0, %v1945
    %v1947 = vrcp.pop %v1946
    %v1948 = vmul.f32 1.0, %v1947
    %v1949 = vmul.f32 %v1930, %v1933
    %v1950 = vadd.f32 %v1941, %v1949
    %v1951 = vmul.f32 %v1931, %v1932
    %v1952 = vadd.f32 %v1950, %v1951
    %v1953 = vmul.f32 %v1952, %v1948
    %v1954 = vmul.f32 %v1918, %v1921
    %v1955 = vmul.f32 %v1954, %v1946
    %v1956 = vmul.f32 %v1955, 0.1
    %v1957 = vmul.f32 %v1953, %v1956
    %v1958 = vadd.f32 %v1957, 1.0
    %v1959 = vlaneseq
    %v1960 = vand.u32 %v1959, 127
    %v1961 = vld [vmem:[%s6] sm:$0xff]
    %1962 = vset.pattern.permute.xlu0 0
    %1963 = vperm.xlu0 %1962, %v1961
    %v1964 = vpop.permute.xlu0 %1963
    %vm1965 = vcmp.eq.s32.totalorder %v1960, %v1964
    %v1966 = vsel %vm1965, 1, 0
    %v1967 = vcvt.s32.f32 %v1966
    %1969 = vrot.lane.b32.xlu0 %v1914, 10
    %v1970 = vpop.permute.xlu0 %1969
    %1973 = vrot.lane.b32.xlu0 %v1958, 20
    %v1974 = vpop.permute.xlu0 %1973
    %v1976 = vsel %vm1915, %v1913, %v1970
    %vm1977 = vcmask 162816
    %v1978 = vsel %vm1977, %v1976, %v1974
    %v1979 = vadd.f32 %v1978, 1.0
    %v1980 = vadd.f32 %v1979, %v1978
    %v1981 = vmul.f32 %v1978, %v1979
    %v1982 = vadd.f32 %v1978, 2.0
    %v1983 = vmul.f32 %v1980, %v1982
    %v1984 = vadd.f32 %v1983, %v1981
    %v1985 = vmul.f32 %v1981, %v1982
    %v1986 = vadd.f32 %v1978, 3.0
    %v1987 = vmul.f32 %v1984, %v1986
    %v1988 = vadd.f32 %v1987, %v1985
    %v1989 = vmul.f32 %v1985, %v1986
    %v1990 = vadd.f32 %v1978, 4.0
    %v1991 = vmul.f32 %v1988, %v1990
    %v1992 = vadd.f32 %v1991, %v1989
    %v1993 = vmul.f32 %v1989, %v1990
    %v1994 = vadd.f32 %v1978, 5.0
    %v1995 = vmul.f32 %v1992, %v1994
    %v1996 = vadd.f32 %v1995, %v1993
    %v1997 = vmul.f32 %v1993, %v1994
    %v1998 = vadd.f32 %v1978, 6.0
    %v1999 = vrcp.pop %v1998
    %v2000 = vmul.f32 1.0, %v1999
    %v2001 = vmul.f32 %v2000, %v2000
    %v2002 = vlog2.pop %v1998
    %v2003 = vmul.f32 %v2002, 0.6931472
    %v2004 = vmul.f32 %v2000, 0.5
    %v2005 = vsub.f32 %v2003, %v2004
    %v2006 = vmul.f32 %v2001, 0.003968254
    %v2007 = vsub.f32 0.008333334, %v2006
    %v2008 = vmul.f32 %v2001, %v2007
    %v2009 = vsub.f32 0.083333336, %v2008
    %v2010 = vmul.f32 %v2001, %v2009
    %v2011 = vsub.f32 %v2005, %v2010
    %v2012 = vrcp.pop %v1997
    %v2013 = vmul.f32 %v1996, %v2012
    %v2014 = vsub.f32 %v2011, %v2013
    %2016 = vrot.lane.b32.xlu0 %v1967, 10
    %v2017 = vpop.permute.xlu0 %2016
    %2019 = vrot.lane.b32.xlu0 %v1967, 20
    %v2020 = vpop.permute.xlu0 %2019
    %v2022 = vsel %vm1915, %v1967, %v2017
    %v2023 = vsel %vm1977, %v2022, %v2020
    %v2024 = vmul.f32 %v2023, %v2014
    %vm2025 = vcmask 244736
    %v2026 = vsel %vm2025, %v2024, 0.0
    %2027 = vadd.xlane.f32.xlu0 %v2026
    %v2028 = vpop.xlane.xlu0 %2027
    %v2029 = vsel %vm1915, %v1958, 0.0
    %2030 = vadd.xlane.f32.xlu0 %v2029
    %v2031 = vpop.xlane.xlu0 %2030
    %v2032 = vrcp.pop %v1918
    %v2033 = vmul.f32 1.0, %v2032
    %v2034 = vmul.f32 %v2033, %v2033
    %v2035 = vlog2.pop %v1918
    %v2036 = vmul.f32 %v2035, 0.6931472
    %v2037 = vmul.f32 %v2033, 0.5
    %v2038 = vsub.f32 %v2036, %v2037
    %v2039 = vmul.f32 %v2034, 0.003968254
    %v2040 = vsub.f32 0.008333334, %v2039
    %v2041 = vmul.f32 %v2034, %v2040
    %v2042 = vsub.f32 0.083333336, %v2041
    %v2043 = vmul.f32 %v2034, %v2042
    %v2044 = vsub.f32 %v2038, %v2043
    %v2045 = vrcp.pop %v1921
    %v2046 = vmul.f32 1.0, %v2045
    %v2047 = vmul.f32 %v2046, %v2046
    %v2048 = vlog2.pop %v1921
    %v2049 = vmul.f32 %v2048, 0.6931472
    %v2050 = vmul.f32 %v2046, 0.5
    %v2051 = vsub.f32 %v2049, %v2050
    %v2052 = vmul.f32 %v2047, 0.003968254
    %v2053 = vsub.f32 0.008333334, %v2052
    %v2054 = vmul.f32 %v2047, %v2053
    %v2055 = vsub.f32 0.083333336, %v2054
    %v2056 = vmul.f32 %v2047, %v2055
    %v2057 = vsub.f32 %v2051, %v2056
    %v2058 = vadd.f32 %v2044, %v2057
    %v2059 = vrcp.pop %v2031
    %v2060 = vmul.f32 1.0, %v2059
    %v2061 = vmul.f32 %v2060, %v2060
    %v2062 = vlog2.pop %v2031
    %v2063 = vmul.f32 %v2062, 0.6931472
    %v2064 = vmul.f32 %v2060, 0.5
    %v2065 = vsub.f32 %v2063, %v2064
    %v2066 = vmul.f32 %v2061, 0.003968254
    %v2067 = vsub.f32 0.008333334, %v2066
    %v2068 = vmul.f32 %v2061, %v2067
    %v2069 = vsub.f32 0.083333336, %v2068
    %v2070 = vmul.f32 %v2061, %v2069
    %v2071 = vsub.f32 %v2065, %v2070
    %v2072 = vadd.f32 %v2058, %v2071
    %v2073 = vsub.f32 %v2072, %v2028
    %2074 = vst.msk [vmem:[#allocation2] sm:$0xff] %vm1915, %v1957
    %vm2075 = vcmask 7168
    %2076 = vst.msk [vmem:[%s8] sm:$0xff] %vm2075, %v2073
    // Predicated region
    $region30: #{tpu_custom_call.1} parent=1 // pred_check
      _
    $region31: #{tpu_custom_call.1} parent=1 // pred_check_branch
      %2078 = sbr.rel (0) target = $region33
    $region32: #{tpu_custom_call.1} parent=1 // pred_region
      %s2080 = ssub.s32 128, 128
      %2081 = vsyncadd [#allocation3], %s2080
      %s2083 = sshll.u32 [#allocation2], 4
      %s2084 = int_to_ptr.vmem [resolvable:$true] %s2083
      %2086 = dma.vmem_to_hbm [thread:$0]  %s2084, 128, %s7, [#allocation3]
    $region33: #{tpu_custom_call.1} parent=1 // pred_fallthru
      _
    // Predicated region
    $region34: #{tpu_custom_call.1} parent=1 // pred_check
      _
    $region35: #{tpu_custom_call.1} parent=1 // pred_check_branch
      %2088 = sbr.rel (0) target = $region37
    $region36: #{tpu_custom_call.1} parent=1 // pred_region
      _
    $region37: #{tpu_custom_call.1} parent=1 // pred_fallthru
      _
    // Predicated region
    $region38: #{tpu_custom_call.1} parent=1 // pred_check
      _
    $region39: #{tpu_custom_call.1} parent=1 // pred_check_branch
      %2090 = sbr.rel (0) target = $region41
    $region40: #{tpu_custom_call.1} parent=1 // pred_region
      %2091 = dma.done [#allocation3], 128
    $region41: #{tpu_custom_call.1} parent=1 // pred_fallthru
      _
    // Predicated region
    $region42: #{tpu_custom_call.1} parent=1 // pred_check
      _
    $region43: #{tpu_custom_call.1} parent=1 // pred_check_branch
      %2093 = sbr.rel (0) target = $region45
    $region44: #{tpu_custom_call.1} parent=1 // pred_region
      _
    $region45: #{tpu_custom_call.1} parent=1 // pred_fallthru
      _
    %2094 = vsyncpa [#allocation3], 1

</llo_original>
